<compile_context>
chip_gen: v6e
topology: v6e:2x2x1
jax: 0.10.0
libtpu: 0.0.40
codegen_flags: <defaults>
</compile_context>

<pallas_src>
import functools

import jax
import jax.numpy as jnp
from jax.experimental import pallas as pl
from jax.experimental.pallas import tpu as pltpu

# ----------------------------- model config ---------------------------------
# From the module-level code: channels=1, patch_size=image_size//8,
# embedding_dims = channels * patch_size**2, num_heads = embedding_dims//64.
# Pick a config so embedding_dims = 128 (lane-dense) -> num_heads = 2,
# head_dim = 64.  Small, TPU-friendly shapes.
EMBED = 128
NUM_HEADS = 2
HEAD_DIM = EMBED // NUM_HEADS
MLP_SIZE = 256
SEQ = 8
BATCH = 2
LN_EPS = 1e-5


# ------------------------------- kernel -------------------------------------
def _layernorm(x, gamma, beta):
    # PyTorch nn.LayerNorm: biased variance, eps inside the sqrt.  All f32.
    # One-pass statistics: var = E[x^2] - mean^2 (one XLU reduce fewer).
    n = x.shape[-1]
    inv_n = 1.0 / n
    s1 = jnp.sum(x, axis=-1, keepdims=True)
    s2 = jnp.sum(x * x, axis=-1, keepdims=True)
    mean = s1 * inv_n
    var = s2 * inv_n - mean * mean
    inv = jax.lax.rsqrt(var + LN_EPS)
    return (x - mean) * inv * gamma + beta


def transformer_block_kernel(
    x_ref,                       # (M, E)   f32, M = B*S
    ln1_g_ref, ln1_b_ref,        # (1, E)   f32
    wqkv_ref, bqkv_ref,          # (E, 3E)  bf16 / (1, 3E) f32
    wo_ref, bo_ref,              # (E, E)   bf16 / (1, E)  f32
    ln2_g_ref, ln2_b_ref,        # (1, E)   f32
    w1_ref, b1_ref,              # (E, MLP) bf16 / (1, MLP) f32
    w2_ref, b2_ref,              # (MLP, E) bf16 / (1, E)  f32
    o_ref,                       # (M, E)   f32
    *, batch, seq, num_heads,
):
    bf16 = jnp.bfloat16
    f32 = jnp.float32

    x = x_ref[...]                                  # (M, E) f32
    M, E = x.shape
    D = E // num_heads

    # ---------------- MSA block ----------------
    y = _layernorm(x, ln1_g_ref[...], ln1_b_ref[...])
    yb = y.astype(bf16)

    # Fused QKV projection: one (M,128)x(128,384) MXU pass, one bias add.
    qkv = jnp.dot(yb, wqkv_ref[...], preferred_element_type=f32) + bqkv_ref[...]
    # Lane-aligned (multiple-of-128 offset) slices -> no relayout.
    # Fold 1/sqrt(head_dim) into q (matches PyTorch MHA: q * scaling).
    q = qkv[:, 0:E] * (1.0 / (D ** 0.5))
    k = qkv[:, E:2 * E]
    v = qkv[:, 2 * E:3 * E]

    head_outs = []
    for h in range(num_heads):                      # static unrolled loop
        sl = slice(h * D, (h + 1) * D)
        # Split sublanes back into (B, S, D) for the batched attention einsums
        # (no cross-batch mixing).
        qh = q[:, sl].reshape(batch, seq, D).astype(bf16)
        kh = k[:, sl].reshape(batch, seq, D).astype(bf16)
        vh = v[:, sl].reshape(batch, seq, D).astype(bf16)

        s = jnp.einsum("bqd,bkd->bqk", qh, kh,
                       preferred_element_type=f32)          # (B, S, S) f32
        s = s - jnp.max(s, axis=-1, keepdims=True)
        p = jnp.exp(s)
        # Exact reciprocal: attention rows sum to 1 (matches torch softmax).
        p = p * pl.reciprocal(jnp.sum(p, axis=-1, keepdims=True), approx=False)

        oh = jnp.einsum("bqk,bkd->bqd", p.astype(bf16), vh,
                        preferred_element_type=f32)          # (B, S, D) f32
        head_outs.append(oh.reshape(M, D))

    # Lane-concat heads (64 + 64 -> 128) and do ONE full-K output projection.
    attn_heads = jnp.concatenate(head_outs, axis=-1).astype(bf16)   # (M, E)
    attn = jnp.dot(attn_heads, wo_ref[...],
                   preferred_element_type=f32) + bo_ref[...]
    x1 = attn + x                                    # residual 1 (f32)

    # ---------------- MLP block ----------------
    z = _layernorm(x1, ln2_g_ref[...], ln2_b_ref[...])
    h1 = jnp.dot(z.astype(bf16), w1_ref[...],
                 preferred_element_type=f32) + b1_ref[...]
    # Exact (erf-based) GELU, matching torch.nn.GELU() default.  f32 math.
    h1 = 0.5 * h1 * (1.0 + jax.lax.erf(h1 * (2.0 ** -0.5)))
    h2 = jnp.dot(h1.astype(bf16), w2_ref[...],
                 preferred_element_type=f32) + b2_ref[...]
    o_ref[...] = (h2 + x1).astype(o_ref.dtype)       # residual 2


# ------------------------------- wrapper -------------------------------------
def _full_spec(shape):
    nd = len(shape)
    return pl.BlockSpec(shape, lambda i, _nd=nd: (0,) * _nd)


@jax.jit
def transformer_block(x, kparams):
    B, S, E = x.shape
    M = B * S
    (ln1_g, ln1_b, wqkv, bqkv, wo, bo,
     ln2_g, ln2_b, w1, b1, w2, b2) = kparams

    # The lane slicing / (M, E) folding below assumes a lane-dense embedding
    # and 64-wide heads; guard the hard-coded constants.
    assert E == EMBED and E % 128 == 0, "kernel assumes E is a multiple of 128"
    assert E % NUM_HEADS == 0 and E // NUM_HEADS == HEAD_DIM == 64, \
        "head slicing hard-coded for head_dim=64"

    x2 = x.reshape(M, E)                      # fold B*S into the matmul M dim
    args = (x2, ln1_g, ln1_b, wqkv, bqkv, wo, bo,
            ln2_g, ln2_b, w1, b1, w2, b2)

    mlp = w1.shape[1]
    hd = E // NUM_HEADS
    flops = (2 * M * E * (3 * E)                    # fused QKV projection
             + 2 * B * NUM_HEADS * 2 * S * S * hd   # QK^T + PV
             + 2 * M * E * E                        # output projection
             + 2 * 2 * M * E * mlp)                 # MLP
    transcendentals = (B * NUM_HEADS * S * S        # softmax exp
                       + M * mlp                    # GELU erf
                       + 2 * M                      # LN rsqrt
                       + B * NUM_HEADS * S)         # softmax reciprocal
    bytes_accessed = (sum(int(a.size) * a.dtype.itemsize for a in args)
                      + M * E * 4)

    out2 = pl.pallas_call(
        functools.partial(transformer_block_kernel,
                          batch=B, seq=S, num_heads=NUM_HEADS),
        out_shape=jax.ShapeDtypeStruct((M, E), x.dtype),
        grid_spec=pltpu.PrefetchScalarGridSpec(
            num_scalar_prefetch=0,
            grid=(1,),                               # single step: weights
            in_specs=[_full_spec(a.shape) for a in args],  # loaded exactly once
            out_specs=_full_spec((M, E)),
        ),
        compiler_params=pltpu.CompilerParams(
            dimension_semantics=("arbitrary",),
        ),
        cost_estimate=pl.CostEstimate(
            flops=flops,
            transcendentals=transcendentals,
            bytes_accessed=bytes_accessed,
        ),
    )(*args)
    return out2.reshape(B, S, E)


# --------------------------- parameter creation ------------------------------
def init_params(key):
    """f32 'master' parameters (used by the pure-JAX reference)."""
    ks = jax.random.split(key, 8)
    f32 = jnp.float32
    # LayerNorm params (stored as (1, E) rows for lane-friendly broadcast).
    ln1_g = jnp.ones((1, EMBED), f32)
    ln1_b = jnp.zeros((1, EMBED), f32)
    ln2_g = jnp.ones((1, EMBED), f32)
    ln2_b = jnp.zeros((1, EMBED), f32)
    # Attention in_proj (pre-transposed so the kernel does y @ W).
    wq = jax.random.normal(ks[0], (EMBED, EMBED), f32) * 0.02
    wk = jax.random.normal(ks[1], (EMBED, EMBED), f32) * 0.02
    wv = jax.random.normal(ks[2], (EMBED, EMBED), f32) * 0.02
    bq = jnp.zeros((1, EMBED), f32)
    bk = jnp.zeros((1, EMBED), f32)
    bv = jnp.zeros((1, EMBED), f32)
    wo = jax.random.normal(ks[3], (EMBED, EMBED), f32) * 0.02
    bo = jnp.zeros((1, EMBED), f32)
    # MLP (pre-transposed).
    w1 = jax.random.normal(ks[4], (EMBED, MLP_SIZE), f32) * 0.02
    b1 = jax.random.normal(ks[5], (1, MLP_SIZE), f32) * 0.02
    w2 = jax.random.normal(ks[6], (MLP_SIZE, EMBED), f32) * 0.02
    b2 = jax.random.normal(ks[7], (1, EMBED), f32) * 0.02
    return (ln1_g, ln1_b, wq, wk, wv, bq, bk, bv, wo, bo,
            ln2_g, ln2_b, w1, b1, w2, b2)


def prepare_kernel_params(params):
    """One-time prep (outside the per-call jit): fuse QKV + cast matmul
    weights to bf16.  Biases / LN params stay f32."""
    (ln1_g, ln1_b, wq, wk, wv, bq, bk, bv, wo, bo,
     ln2_g, ln2_b, w1, b1, w2, b2) = params
    bf16 = jnp.bfloat16
    wqkv = jnp.concatenate([wq, wk, wv], axis=1).astype(bf16)   # (E, 3E)
    bqkv = jnp.concatenate([bq, bk, bv], axis=1)                # (1, 3E) f32
    return (ln1_g, ln1_b, wqkv, bqkv, wo.astype(bf16), bo,
            ln2_g, ln2_b, w1.astype(bf16), b1, w2.astype(bf16), b2)


# ------------------------------ pure-JAX reference ---------------------------
def reference(x, params):
    (ln1_g, ln1_b, wq, wk, wv, bq, bk, bv, wo, bo,
     ln2_g, ln2_b, w1, b1, w2, b2) = params

    def ln(t, g, b):
        m = jnp.mean(t, axis=-1, keepdims=True)
        v = jnp.mean((t - m) ** 2, axis=-1, keepdims=True)
        return (t - m) / jnp.sqrt(v + LN_EPS) * g + b

    y = ln(x, ln1_g, ln1_b)
    q = y @ wq + bq
    k = y @ wk + bk
    v = y @ wv + bv
    B, S, E = x.shape
    qh = q.reshape(B, S, NUM_HEADS, HEAD_DIM).transpose(0, 2, 1, 3)
    kh = k.reshape(B, S, NUM_HEADS, HEAD_DIM).transpose(0, 2, 1, 3)
    vh = v.reshape(B, S, NUM_HEADS, HEAD_DIM).transpose(0, 2, 1, 3)
    s = jnp.einsum("bhqd,bhkd->bhqk", qh, kh) / (HEAD_DIM ** 0.5)
    p = jax.nn.softmax(s, axis=-1)
    o = jnp.einsum("bhqk,bhkd->bhqd", p, vh).transpose(0, 2, 1, 3).reshape(B, S, E)
    x1 = (o @ wo + bo) + x
    z = ln(x1, ln2_g, ln2_b)
    h1 = jax.nn.gelu(z @ w1 + b1, approximate=False)
    return (h1 @ w2 + b2) + x1


# --------------------------------- main ---------------------------------------
if __name__ == "__main__":
    key = jax.random.PRNGKey(0)
    kx, kp = jax.random.split(key)
    x = jax.random.normal(kx, (BATCH, SEQ, EMBED), jnp.float32)
    params = init_params(kp)
    kparams = prepare_kernel_params(params)   # one-time: QKV fuse + bf16 cast

    out = transformer_block(x, kparams)
    out = jax.block_until_ready(out)

    ref = reference(x, params)
    assert out.shape == (BATCH, SEQ, EMBED)
    # bf16 matmul operands (f32 accumulation) => loosen tolerance relative to
    # the pure-f32 reference.
    max_err = float(jnp.max(jnp.abs(out - ref)))
    assert jnp.allclose(out, ref, atol=3e-2, rtol=3e-2), max_err

    print("KERNEL_OK")
</pallas_src>

<mosaic_0001>
module attributes {stable_mosaic.version = 11 : i64} {
  func.func @transformer_block_kernel(%arg0: i32, %arg1: memref<16x128xf32, #tpu.memory_space<vmem>>, %arg2: memref<1x128xf32, #tpu.memory_space<vmem>>, %arg3: memref<1x128xf32, #tpu.memory_space<vmem>>, %arg4: memref<128x384xbf16, #tpu.memory_space<vmem>>, %arg5: memref<1x384xf32, #tpu.memory_space<vmem>>, %arg6: memref<128x128xbf16, #tpu.memory_space<vmem>>, %arg7: memref<1x128xf32, #tpu.memory_space<vmem>>, %arg8: memref<1x128xf32, #tpu.memory_space<vmem>>, %arg9: memref<1x128xf32, #tpu.memory_space<vmem>>, %arg10: memref<128x256xbf16, #tpu.memory_space<vmem>>, %arg11: memref<1x256xf32, #tpu.memory_space<vmem>>, %arg12: memref<256x128xbf16, #tpu.memory_space<vmem>>, %arg13: memref<1x128xf32, #tpu.memory_space<vmem>>, %arg14: memref<16x128xf32, #tpu.memory_space<vmem>>) attributes {dimension_semantics = [#tpu.dimension_semantics<arbitrary>], iteration_bounds = array<i64: 1>, scalar_prefetch = 0 : i64, scratch_operands = 0 : i64, tpu.core_type = #tpu.core_type<tc>, window_params = [{pipeline_mode = #tpu.pipeline_mode<synchronous>, transform_indices = @transform_0, window_bounds = array<i64: 16, 128>}, {pipeline_mode = #tpu.pipeline_mode<synchronous>, transform_indices = @transform_1, window_bounds = array<i64: 1, 128>}, {pipeline_mode = #tpu.pipeline_mode<synchronous>, transform_indices = @transform_2, window_bounds = array<i64: 1, 128>}, {pipeline_mode = #tpu.pipeline_mode<synchronous>, transform_indices = @transform_3, window_bounds = array<i64: 128, 384>}, {pipeline_mode = #tpu.pipeline_mode<synchronous>, transform_indices = @transform_4, window_bounds = array<i64: 1, 384>}, {pipeline_mode = #tpu.pipeline_mode<synchronous>, transform_indices = @transform_5, window_bounds = array<i64: 128, 128>}, {pipeline_mode = #tpu.pipeline_mode<synchronous>, transform_indices = @transform_6, window_bounds = array<i64: 1, 128>}, {pipeline_mode = #tpu.pipeline_mode<synchronous>, transform_indices = @transform_7, window_bounds = array<i64: 1, 128>}, {pipeline_mode = #tpu.pipeline_mode<synchronous>, transform_indices = @transform_8, window_bounds = array<i64: 1, 128>}, {pipeline_mode = #tpu.pipeline_mode<synchronous>, transform_indices = @transform_9, window_bounds = array<i64: 128, 256>}, {pipeline_mode = #tpu.pipeline_mode<synchronous>, transform_indices = @transform_10, window_bounds = array<i64: 1, 256>}, {pipeline_mode = #tpu.pipeline_mode<synchronous>, transform_indices = @transform_11, window_bounds = array<i64: 256, 128>}, {pipeline_mode = #tpu.pipeline_mode<synchronous>, transform_indices = @transform_12, window_bounds = array<i64: 1, 128>}, {pipeline_mode = #tpu.pipeline_mode<synchronous>, transform_indices = @transform_13, window_bounds = array<i64: 16, 128>}]} {
    %c0 = arith.constant 0 : index
    %c0_0 = arith.constant 0 : index
    %0 = vector.load %arg1[%c0, %c0_0] : memref<16x128xf32, #tpu.memory_space<vmem>>, vector<16x128xf32>
    %c0_1 = arith.constant 0 : index
    %c0_2 = arith.constant 0 : index
    %1 = vector.load %arg2[%c0_1, %c0_2] : memref<1x128xf32, #tpu.memory_space<vmem>>, vector<1x128xf32>
    %c0_3 = arith.constant 0 : index
    %c0_4 = arith.constant 0 : index
    %2 = vector.load %arg3[%c0_3, %c0_4] : memref<1x128xf32, #tpu.memory_space<vmem>>, vector<1x128xf32>
    %cst = arith.constant dense<0.000000e+00> : vector<16xf32>
    %3 = vector.multi_reduction <add>, %0, %cst [1] : vector<16x128xf32> to vector<16xf32>
    %4 = vector.shape_cast %3 : vector<16xf32> to vector<16x1xf32>
    %5 = arith.mulf %0, %0 : vector<16x128xf32>
    %cst_5 = arith.constant dense<0.000000e+00> : vector<16xf32>
    %6 = vector.multi_reduction <add>, %5, %cst_5 [1] : vector<16x128xf32> to vector<16xf32>
    %7 = vector.shape_cast %6 : vector<16xf32> to vector<16x1xf32>
    %cst_6 = arith.constant 7.812500e-03 : f32
    %8 = vector.broadcast %cst_6 : f32 to vector<16x1xf32>
    %9 = arith.mulf %4, %8 : vector<16x1xf32>
    %cst_7 = arith.constant 7.812500e-03 : f32
    %10 = vector.broadcast %cst_7 : f32 to vector<16x1xf32>
    %11 = arith.mulf %7, %10 : vector<16x1xf32>
    %12 = arith.mulf %9, %9 : vector<16x1xf32>
    %13 = arith.subf %11, %12 : vector<16x1xf32>
    %cst_8 = arith.constant 9.99999974E-6 : f32
    %14 = vector.broadcast %cst_8 : f32 to vector<16x1xf32>
    %15 = arith.addf %13, %14 : vector<16x1xf32>
    %16 = math.rsqrt %15 : vector<16x1xf32>
    %17 = vector.broadcast %9 : vector<16x1xf32> to vector<16x128xf32>
    %18 = arith.subf %0, %17 : vector<16x128xf32>
    %19 = vector.broadcast %16 : vector<16x1xf32> to vector<16x128xf32>
    %20 = arith.mulf %18, %19 : vector<16x128xf32>
    %21 = vector.broadcast %1 : vector<1x128xf32> to vector<16x128xf32>
    %22 = arith.mulf %20, %21 : vector<16x128xf32>
    %23 = vector.broadcast %2 : vector<1x128xf32> to vector<16x128xf32>
    %24 = arith.addf %22, %23 : vector<16x128xf32>
    %25 = arith.truncf %24 : vector<16x128xf32> to vector<16x128xbf16>
    %c0_9 = arith.constant 0 : index
    %c0_10 = arith.constant 0 : index
    %26 = vector.load %arg4[%c0_9, %c0_10] : memref<128x384xbf16, #tpu.memory_space<vmem>>, vector<128x384xbf16>
    %cst_11 = arith.constant dense<0.000000e+00> : vector<16x384xf32>
    %27 = tpu.matmul %25, %26, %cst_11 {dimension_numbers = #tpu.dot_dimension_numbers<[1], [0], [0], [1], [0, 0, 1, 1], [], []>} : vector<16x128xbf16>, vector<128x384xbf16>, vector<16x384xf32> -> vector<16x384xf32>
    %c0_12 = arith.constant 0 : index
    %c0_13 = arith.constant 0 : index
    %28 = vector.load %arg5[%c0_12, %c0_13] : memref<1x384xf32, #tpu.memory_space<vmem>>, vector<1x384xf32>
    %29 = vector.broadcast %28 : vector<1x384xf32> to vector<16x384xf32>
    %30 = arith.addf %27, %29 : vector<16x384xf32>
    %31 = vector.extract_strided_slice %30 {offsets = [0, 0], sizes = [16, 128], strides = [1, 1]} : vector<16x384xf32> to vector<16x128xf32>
    %cst_14 = arith.constant 1.250000e-01 : f32
    %32 = vector.broadcast %cst_14 : f32 to vector<16x128xf32>
    %33 = arith.mulf %31, %32 : vector<16x128xf32>
    %34 = vector.extract_strided_slice %30 {offsets = [0, 128], sizes = [16, 128], strides = [1, 1]} : vector<16x384xf32> to vector<16x128xf32>
    %35 = vector.extract_strided_slice %30 {offsets = [0, 256], sizes = [16, 128], strides = [1, 1]} : vector<16x384xf32> to vector<16x128xf32>
    %36 = vector.extract_strided_slice %33 {offsets = [0, 0], sizes = [16, 64], strides = [1, 1]} : vector<16x128xf32> to vector<16x64xf32>
    %37 = vector.shape_cast %36 : vector<16x64xf32> to vector<2x8x64xf32>
    %38 = arith.truncf %37 : vector<2x8x64xf32> to vector<2x8x64xbf16>
    %39 = vector.extract_strided_slice %34 {offsets = [0, 0], sizes = [16, 64], strides = [1, 1]} : vector<16x128xf32> to vector<16x64xf32>
    %40 = vector.shape_cast %39 : vector<16x64xf32> to vector<2x8x64xf32>
    %41 = arith.truncf %40 : vector<2x8x64xf32> to vector<2x8x64xbf16>
    %42 = vector.extract_strided_slice %35 {offsets = [0, 0], sizes = [16, 64], strides = [1, 1]} : vector<16x128xf32> to vector<16x64xf32>
    %43 = vector.shape_cast %42 : vector<16x64xf32> to vector<2x8x64xf32>
    %44 = arith.truncf %43 : vector<2x8x64xf32> to vector<2x8x64xbf16>
    "tpu.trace_start"() <{level = 10 : i32, message = "bqd,bkd->bqk"}> : () -> ()
    %cst_15 = arith.constant dense<0.000000e+00> : vector<2x8x8xf32>
    %45 = tpu.matmul %38, %41, %cst_15 {dimension_numbers = #tpu.dot_dimension_numbers<[2], [2], [1], [1], [0, 0, 0, 1, 1, 1], [0], [0]>} : vector<2x8x64xbf16>, vector<2x8x64xbf16>, vector<2x8x8xf32> -> vector<2x8x8xf32>
    "tpu.trace_stop"() : () -> ()
    %cst_16 = arith.constant dense<0xFF800000> : vector<2x8xf32>
    %46 = vector.multi_reduction <maximumf>, %45, %cst_16 [2] : vector<2x8x8xf32> to vector<2x8xf32>
    %47 = vector.shape_cast %46 : vector<2x8xf32> to vector<2x8x1xf32>
    %48 = vector.broadcast %47 : vector<2x8x1xf32> to vector<2x8x8xf32>
    %49 = arith.subf %45, %48 : vector<2x8x8xf32>
    %50 = math.exp %49 : vector<2x8x8xf32>
    %cst_17 = arith.constant dense<0.000000e+00> : vector<2x8xf32>
    %51 = vector.multi_reduction <add>, %50, %cst_17 [2] : vector<2x8x8xf32> to vector<2x8xf32>
    %52 = vector.shape_cast %51 : vector<2x8xf32> to vector<2x8x1xf32>
    %53 = tpu.reciprocal %52 : vector<2x8x1xf32> -> vector<2x8x1xf32>
    %54 = vector.broadcast %53 : vector<2x8x1xf32> to vector<2x8x8xf32>
    %55 = arith.mulf %50, %54 : vector<2x8x8xf32>
    %56 = arith.truncf %55 : vector<2x8x8xf32> to vector<2x8x8xbf16>
    "tpu.trace_start"() <{level = 10 : i32, message = "bqk,bkd->bqd"}> : () -> ()
    %cst_18 = arith.constant dense<0.000000e+00> : vector<2x8x64xf32>
    %57 = tpu.matmul %56, %44, %cst_18 {dimension_numbers = #tpu.dot_dimension_numbers<[2], [1], [1], [2], [0, 0, 0, 1, 1, 2], [0], [0]>} : vector<2x8x8xbf16>, vector<2x8x64xbf16>, vector<2x8x64xf32> -> vector<2x8x64xf32>
    "tpu.trace_stop"() : () -> ()
    %58 = vector.shape_cast %57 : vector<2x8x64xf32> to vector<16x64xf32>
    %59 = vector.extract_strided_slice %33 {offsets = [0, 64], sizes = [16, 64], strides = [1, 1]} : vector<16x128xf32> to vector<16x64xf32>
    %60 = vector.shape_cast %59 : vector<16x64xf32> to vector<2x8x64xf32>
    %61 = arith.truncf %60 : vector<2x8x64xf32> to vector<2x8x64xbf16>
    %62 = vector.extract_strided_slice %34 {offsets = [0, 64], sizes = [16, 64], strides = [1, 1]} : vector<16x128xf32> to vector<16x64xf32>
    %63 = vector.shape_cast %62 : vector<16x64xf32> to vector<2x8x64xf32>
    %64 = arith.truncf %63 : vector<2x8x64xf32> to vector<2x8x64xbf16>
    %65 = vector.extract_strided_slice %35 {offsets = [0, 64], sizes = [16, 64], strides = [1, 1]} : vector<16x128xf32> to vector<16x64xf32>
    %66 = vector.shape_cast %65 : vector<16x64xf32> to vector<2x8x64xf32>
    %67 = arith.truncf %66 : vector<2x8x64xf32> to vector<2x8x64xbf16>
    "tpu.trace_start"() <{level = 10 : i32, message = "bqd,bkd->bqk"}> : () -> ()
    %cst_19 = arith.constant dense<0.000000e+00> : vector<2x8x8xf32>
    %68 = tpu.matmul %61, %64, %cst_19 {dimension_numbers = #tpu.dot_dimension_numbers<[2], [2], [1], [1], [0, 0, 0, 1, 1, 1], [0], [0]>} : vector<2x8x64xbf16>, vector<2x8x64xbf16>, vector<2x8x8xf32> -> vector<2x8x8xf32>
    "tpu.trace_stop"() : () -> ()
    %cst_20 = arith.constant dense<0xFF800000> : vector<2x8xf32>
    %69 = vector.multi_reduction <maximumf>, %68, %cst_20 [2] : vector<2x8x8xf32> to vector<2x8xf32>
    %70 = vector.shape_cast %69 : vector<2x8xf32> to vector<2x8x1xf32>
    %71 = vector.broadcast %70 : vector<2x8x1xf32> to vector<2x8x8xf32>
    %72 = arith.subf %68, %71 : vector<2x8x8xf32>
    %73 = math.exp %72 : vector<2x8x8xf32>
    %cst_21 = arith.constant dense<0.000000e+00> : vector<2x8xf32>
    %74 = vector.multi_reduction <add>, %73, %cst_21 [2] : vector<2x8x8xf32> to vector<2x8xf32>
    %75 = vector.shape_cast %74 : vector<2x8xf32> to vector<2x8x1xf32>
    %76 = tpu.reciprocal %75 : vector<2x8x1xf32> -> vector<2x8x1xf32>
    %77 = vector.broadcast %76 : vector<2x8x1xf32> to vector<2x8x8xf32>
    %78 = arith.mulf %73, %77 : vector<2x8x8xf32>
    %79 = arith.truncf %78 : vector<2x8x8xf32> to vector<2x8x8xbf16>
    "tpu.trace_start"() <{level = 10 : i32, message = "bqk,bkd->bqd"}> : () -> ()
    %cst_22 = arith.constant dense<0.000000e+00> : vector<2x8x64xf32>
    %80 = tpu.matmul %79, %67, %cst_22 {dimension_numbers = #tpu.dot_dimension_numbers<[2], [1], [1], [2], [0, 0, 0, 1, 1, 2], [0], [0]>} : vector<2x8x8xbf16>, vector<2x8x64xbf16>, vector<2x8x64xf32> -> vector<2x8x64xf32>
    "tpu.trace_stop"() : () -> ()
    %81 = vector.shape_cast %80 : vector<2x8x64xf32> to vector<16x64xf32>
    %82 = tpu.concatenate %58, %81 in 1 : vector<16x64xf32>, vector<16x64xf32> -> vector<16x128xf32>
    %83 = arith.truncf %82 : vector<16x128xf32> to vector<16x128xbf16>
    %c0_23 = arith.constant 0 : index
    %c0_24 = arith.constant 0 : index
    %84 = vector.load %arg6[%c0_23, %c0_24] : memref<128x128xbf16, #tpu.memory_space<vmem>>, vector<128x128xbf16>
    %cst_25 = arith.constant dense<0.000000e+00> : vector<16x128xf32>
    %85 = tpu.matmul %83, %84, %cst_25 {dimension_numbers = #tpu.dot_dimension_numbers<[1], [0], [0], [1], [0, 0, 1, 1], [], []>} : vector<16x128xbf16>, vector<128x128xbf16>, vector<16x128xf32> -> vector<16x128xf32>
    %c0_26 = arith.constant 0 : index
    %c0_27 = arith.constant 0 : index
    %86 = vector.load %arg7[%c0_26, %c0_27] : memref<1x128xf32, #tpu.memory_space<vmem>>, vector<1x128xf32>
    %87 = vector.broadcast %86 : vector<1x128xf32> to vector<16x128xf32>
    %88 = arith.addf %85, %87 : vector<16x128xf32>
    %89 = arith.addf %88, %0 : vector<16x128xf32>
    %c0_28 = arith.constant 0 : index
    %c0_29 = arith.constant 0 : index
    %90 = vector.load %arg8[%c0_28, %c0_29] : memref<1x128xf32, #tpu.memory_space<vmem>>, vector<1x128xf32>
    %c0_30 = arith.constant 0 : index
    %c0_31 = arith.constant 0 : index
    %91 = vector.load %arg9[%c0_30, %c0_31] : memref<1x128xf32, #tpu.memory_space<vmem>>, vector<1x128xf32>
    %cst_32 = arith.constant dense<0.000000e+00> : vector<16xf32>
    %92 = vector.multi_reduction <add>, %89, %cst_32 [1] : vector<16x128xf32> to vector<16xf32>
    %93 = vector.shape_cast %92 : vector<16xf32> to vector<16x1xf32>
    %94 = arith.mulf %89, %89 : vector<16x128xf32>
    %cst_33 = arith.constant dense<0.000000e+00> : vector<16xf32>
    %95 = vector.multi_reduction <add>, %94, %cst_33 [1] : vector<16x128xf32> to vector<16xf32>
    %96 = vector.shape_cast %95 : vector<16xf32> to vector<16x1xf32>
    %cst_34 = arith.constant 7.812500e-03 : f32
    %97 = vector.broadcast %cst_34 : f32 to vector<16x1xf32>
    %98 = arith.mulf %93, %97 : vector<16x1xf32>
    %cst_35 = arith.constant 7.812500e-03 : f32
    %99 = vector.broadcast %cst_35 : f32 to vector<16x1xf32>
    %100 = arith.mulf %96, %99 : vector<16x1xf32>
    %101 = arith.mulf %98, %98 : vector<16x1xf32>
    %102 = arith.subf %100, %101 : vector<16x1xf32>
    %cst_36 = arith.constant 9.99999974E-6 : f32
    %103 = vector.broadcast %cst_36 : f32 to vector<16x1xf32>
    %104 = arith.addf %102, %103 : vector<16x1xf32>
    %105 = math.rsqrt %104 : vector<16x1xf32>
    %106 = vector.broadcast %98 : vector<16x1xf32> to vector<16x128xf32>
    %107 = arith.subf %89, %106 : vector<16x128xf32>
    %108 = vector.broadcast %105 : vector<16x1xf32> to vector<16x128xf32>
    %109 = arith.mulf %107, %108 : vector<16x128xf32>
    %110 = vector.broadcast %90 : vector<1x128xf32> to vector<16x128xf32>
    %111 = arith.mulf %109, %110 : vector<16x128xf32>
    %112 = vector.broadcast %91 : vector<1x128xf32> to vector<16x128xf32>
    %113 = arith.addf %111, %112 : vector<16x128xf32>
    %114 = arith.truncf %113 : vector<16x128xf32> to vector<16x128xbf16>
    %c0_37 = arith.constant 0 : index
    %c0_38 = arith.constant 0 : index
    %115 = vector.load %arg10[%c0_37, %c0_38] : memref<128x256xbf16, #tpu.memory_space<vmem>>, vector<128x256xbf16>
    %cst_39 = arith.constant dense<0.000000e+00> : vector<16x256xf32>
    %116 = tpu.matmul %114, %115, %cst_39 {dimension_numbers = #tpu.dot_dimension_numbers<[1], [0], [0], [1], [0, 0, 1, 1], [], []>} : vector<16x128xbf16>, vector<128x256xbf16>, vector<16x256xf32> -> vector<16x256xf32>
    %c0_40 = arith.constant 0 : index
    %c0_41 = arith.constant 0 : index
    %117 = vector.load %arg11[%c0_40, %c0_41] : memref<1x256xf32, #tpu.memory_space<vmem>>, vector<1x256xf32>
    %118 = vector.broadcast %117 : vector<1x256xf32> to vector<16x256xf32>
    %119 = arith.addf %116, %118 : vector<16x256xf32>
    %cst_42 = arith.constant 5.000000e-01 : f32
    %120 = vector.broadcast %cst_42 : f32 to vector<16x256xf32>
    %121 = arith.mulf %120, %119 : vector<16x256xf32>
    %cst_43 = arith.constant 0.707106769 : f32
    %122 = vector.broadcast %cst_43 : f32 to vector<16x256xf32>
    %123 = arith.mulf %119, %122 : vector<16x256xf32>
    %124 = math.erf %123 : vector<16x256xf32>
    %cst_44 = arith.constant 1.000000e+00 : f32
    %125 = vector.broadcast %cst_44 : f32 to vector<16x256xf32>
    %126 = arith.addf %125, %124 : vector<16x256xf32>
    %127 = arith.mulf %121, %126 : vector<16x256xf32>
    %128 = arith.truncf %127 : vector<16x256xf32> to vector<16x256xbf16>
    %c0_45 = arith.constant 0 : index
    %c0_46 = arith.constant 0 : index
    %129 = vector.load %arg12[%c0_45, %c0_46] : memref<256x128xbf16, #tpu.memory_space<vmem>>, vector<256x128xbf16>
    %cst_47 = arith.constant dense<0.000000e+00> : vector<16x128xf32>
    %130 = tpu.matmul %128, %129, %cst_47 {dimension_numbers = #tpu.dot_dimension_numbers<[1], [0], [0], [1], [0, 0, 1, 1], [], []>} : vector<16x256xbf16>, vector<256x128xbf16>, vector<16x128xf32> -> vector<16x128xf32>
    %c0_48 = arith.constant 0 : index
    %c0_49 = arith.constant 0 : index
    %131 = vector.load %arg13[%c0_48, %c0_49] : memref<1x128xf32, #tpu.memory_space<vmem>>, vector<1x128xf32>
    %132 = vector.broadcast %131 : vector<1x128xf32> to vector<16x128xf32>
    %133 = arith.addf %130, %132 : vector<16x128xf32>
    %134 = arith.addf %133, %89 : vector<16x128xf32>
    %c0_50 = arith.constant 0 : index
    %c0_51 = arith.constant 0 : index
    %135 = vector.load %arg14[%c0_50, %c0_51] : memref<16x128xf32, #tpu.memory_space<vmem>>, vector<16x128xf32>
    tpu.vector_store %arg14[%c0_50, %c0_51], %134 {strides = array<i32>} : memref<16x128xf32, #tpu.memory_space<vmem>>, vector<16x128xf32>,
    return
  }
  func.func @transform_0(%arg0: i32) -> (i32, i32) {
    %c0_i32 = arith.constant 0 : i32
    %c0_i32_0 = arith.constant 0 : i32
    %c0_i32_1 = arith.constant 0 : i32
    return %c0_i32, %c0_i32_0 : i32, i32
  }
  func.func @transform_1(%arg0: i32) -> (i32, i32) {
    %c0_i32 = arith.constant 0 : i32
    %c0_i32_0 = arith.constant 0 : i32
    %c0_i32_1 = arith.constant 0 : i32
    return %c0_i32, %c0_i32_0 : i32, i32
  }
  func.func @transform_2(%arg0: i32) -> (i32, i32) {
    %c0_i32 = arith.constant 0 : i32
    %c0_i32_0 = arith.constant 0 : i32
    %c0_i32_1 = arith.constant 0 : i32
    return %c0_i32, %c0_i32_0 : i32, i32
  }
  func.func @transform_3(%arg0: i32) -> (i32, i32) {
    %c0_i32 = arith.constant 0 : i32
    %c0_i32_0 = arith.constant 0 : i32
    %c0_i32_1 = arith.constant 0 : i32
    return %c0_i32, %c0_i32_0 : i32, i32
  }
  func.func @transform_4(%arg0: i32) -> (i32, i32) {
    %c0_i32 = arith.constant 0 : i32
    %c0_i32_0 = arith.constant 0 : i32
    %c0_i32_1 = arith.constant 0 : i32
    return %c0_i32, %c0_i32_0 : i32, i32
  }
  func.func @transform_5(%arg0: i32) -> (i32, i32) {
    %c0_i32 = arith.constant 0 : i32
    %c0_i32_0 = arith.constant 0 : i32
    %c0_i32_1 = arith.constant 0 : i32
    return %c0_i32, %c0_i32_0 : i32, i32
  }
  func.func @transform_6(%arg0: i32) -> (i32, i32) {
    %c0_i32 = arith.constant 0 : i32
    %c0_i32_0 = arith.constant 0 : i32
    %c0_i32_1 = arith.constant 0 : i32
    return %c0_i32, %c0_i32_0 : i32, i32
  }
  func.func @transform_7(%arg0: i32) -> (i32, i32) {
    %c0_i32 = arith.constant 0 : i32
    %c0_i32_0 = arith.constant 0 : i32
    %c0_i32_1 = arith.constant 0 : i32
    return %c0_i32, %c0_i32_0 : i32, i32
  }
  func.func @transform_8(%arg0: i32) -> (i32, i32) {
    %c0_i32 = arith.constant 0 : i32
    %c0_i32_0 = arith.constant 0 : i32
    %c0_i32_1 = arith.constant 0 : i32
    return %c0_i32, %c0_i32_0 : i32, i32
  }
  func.func @transform_9(%arg0: i32) -> (i32, i32) {
    %c0_i32 = arith.constant 0 : i32
    %c0_i32_0 = arith.constant 0 : i32
    %c0_i32_1 = arith.constant 0 : i32
    return %c0_i32, %c0_i32_0 : i32, i32
  }
  func.func @transform_10(%arg0: i32) -> (i32, i32) {
    %c0_i32 = arith.constant 0 : i32
    %c0_i32_0 = arith.constant 0 : i32
    %c0_i32_1 = arith.constant 0 : i32
    return %c0_i32, %c0_i32_0 : i32, i32
  }
  func.func @transform_11(%arg0: i32) -> (i32, i32) {
    %c0_i32 = arith.constant 0 : i32
    %c0_i32_0 = arith.constant 0 : i32
    %c0_i32_1 = arith.constant 0 : i32
    return %c0_i32, %c0_i32_0 : i32, i32
  }
  func.func @transform_12(%arg0: i32) -> (i32, i32) {
    %c0_i32 = arith.constant 0 : i32
    %c0_i32_0 = arith.constant 0 : i32
    %c0_i32_1 = arith.constant 0 : i32
    return %c0_i32, %c0_i32_0 : i32, i32
  }
  func.func @transform_13(%arg0: i32) -> (i32, i32) {
    %c0_i32 = arith.constant 0 : i32
    %c0_i32_0 = arith.constant 0 : i32
    %c0_i32_1 = arith.constant 0 : i32
    return %c0_i32, %c0_i32_0 : i32, i32
  }
}

</mosaic_0001>

<llo_original>
// kernel: transformer_block.1
$region0: #{transformer_block.1}
  #allocation0 [shape = 'u32[]', space=smem, size = 0x4, offset = 0x4, fixed_abs, tag = 'smem constant byte address 0x4 - core index']
  #allocation1 [shape = 'u32[144,128]{1,0:T(1,128)}', space=vmem, size = 0x12000, scoped, tag = 'internal scratch']
  %s0 = inlined_call_operand.hbm [shape: f32[16,128], index: 0, kind: input, shape index: {}]
  %s1 = inlined_call_operand.hbm [shape: f32[1,128], index: 1, kind: input, shape index: {}]
  %s2 = inlined_call_operand.hbm [shape: f32[1,128], index: 2, kind: input, shape index: {}]
  %s3 = inlined_call_operand.hbm [shape: bf16[128,384], index: 3, kind: input, shape index: {}]
  %s4 = inlined_call_operand.vmem [shape: f32[1,384], index: 4, kind: input, shape index: {}]
  %s5 = inlined_call_operand.hbm [shape: bf16[128,128], index: 5, kind: input, shape index: {}]
  %s6 = inlined_call_operand.vmem [shape: f32[1,128], index: 6, kind: input, shape index: {}]
  %s7 = inlined_call_operand.vmem [shape: f32[1,128], index: 7, kind: input, shape index: {}]
  %s8 = inlined_call_operand.vmem [shape: f32[1,128], index: 8, kind: input, shape index: {}]
  %s9 = inlined_call_operand.hbm [shape: bf16[128,256], index: 9, kind: input, shape index: {}]
  %s10 = inlined_call_operand.vmem [shape: f32[1,256], index: 10, kind: input, shape index: {}]
  %s11 = inlined_call_operand.hbm [shape: bf16[256,128], index: 11, kind: input, shape index: {}]
  %s12 = inlined_call_operand.vmem [shape: f32[1,128], index: 12, kind: input, shape index: {}]
  %s13 = inlined_call_operand.hbm [shape: f32[16,128], index: 13, kind: output, shape index: {}]
  %s14 = sld [smem:[#allocation0]]
  $region90: #{transformer_block.1} parent=0
    _
  %s16 = ssub.s32 1, %s14
  %s17 = scalar_select 0, %s16, %s14
  $region1: #{transformer_block.1} parent=0
    #allocation2 [shape = 'u8[8192]{0}', space=vmem, size = 0x2000, scoped, tag = 'input window, operand 0, single buffered']
    #allocation3 [shape = 's32[1]{0}', space=sflag, size = 0x4, scoped, tag = 'scoped memory for transformer_block.1']
    #allocation4 [shape = 's32[1]{0}', space=sflag, size = 0x4, scoped, tag = 'scoped memory for transformer_block.1']
    #allocation5 [shape = 'u8[512]{0}', space=vmem, size = 0x400, scoped, tag = 'input window, operand 1, single buffered']
    #allocation6 [shape = 's32[1]{0}', space=sflag, size = 0x4, scoped, tag = 'scoped memory for transformer_block.1']
    #allocation7 [shape = 'u8[512]{0}', space=vmem, size = 0x400, scoped, tag = 'input window, operand 2, single buffered']
    #allocation8 [shape = 'u8[98304]{0}', space=vmem, size = 0x18000, scoped, tag = 'input window, operand 3, single buffered']
    #allocation9 [shape = 's32[1]{0}', space=sflag, size = 0x4, scoped, tag = 'scoped memory for transformer_block.1']
    #allocation10 [shape = 'u8[32768]{0}', space=vmem, size = 0x8000, scoped, tag = 'input window, operand 5, single buffered']
    #allocation11 [shape = 'u8[65536]{0}', space=vmem, size = 0x10000, scoped, tag = 'input window, operand 9, single buffered']
    #allocation12 [shape = 's32[1]{0}', space=sflag, size = 0x4, scoped, tag = 'scoped memory for transformer_block.1']
    #allocation13 [shape = 'u8[65536]{0}', space=vmem, size = 0x10000, scoped, tag = 'input window, operand 11, single buffered']
    #allocation14 [shape = 'u8[8192]{0}', space=vmem, size = 0x2000, scoped, tag = 'output window, operand 0, single buffered']
    %18 = vsyncpa [#allocation3], 0
    %19 = vsyncpa [#allocation6], 0
    %20 = vsyncpa [#allocation9], 0
    %21 = vsyncpa [#allocation12], 0
    %22 = vsyncpa [#allocation4], 0
    // Predicated region
    $region2: #{transformer_block.1} parent=1 // pred_check
      _
    $region3: #{transformer_block.1} parent=1 // pred_check_branch
      %24 = sbr.rel (0) target = $region5
    $region4: #{transformer_block.1} parent=1 // pred_region
      %s26 = ssub.s32 256, 256
      %27 = vsyncadd [#allocation3], %s26
      %s28 = sshll.u32 [#allocation2], 4
      %s29 = int_to_ptr.vmem [resolvable:$true] %s28
      %34 = dma.hbm_to_vmem [thread:$0]  %s0, 256, %s29, [#allocation3], 128, 128, 8
    $region5: #{transformer_block.1} parent=1 // pred_fallthru
      _
    // Predicated region
    $region6: #{transformer_block.1} parent=1 // pred_check
      _
    $region7: #{transformer_block.1} parent=1 // pred_check_branch
      %36 = sbr.rel (0) target = $region9
    $region8: #{transformer_block.1} parent=1 // pred_region
      %s38 = ssub.s32 16, 16
      %39 = vsyncadd [#allocation6], %s38
      %s41 = sshll.u32 [#allocation5], 4
      %s42 = int_to_ptr.vmem [resolvable:$true] %s41
      %44 = dma.hbm_to_vmem [thread:$0]  %s1, 16, %s42, [#allocation6]
    $region9: #{transformer_block.1} parent=1 // pred_fallthru
      _
    // Predicated region
    $region10: #{transformer_block.1} parent=1 // pred_check
      _
    $region11: #{transformer_block.1} parent=1 // pred_check_branch
      %46 = sbr.rel (0) target = $region13
    $region12: #{transformer_block.1} parent=1 // pred_region
      %s48 = ssub.s32 16, 16
      %49 = vsyncadd [#allocation6], %s48
      %s51 = sshll.u32 [#allocation7], 4
      %s52 = int_to_ptr.vmem [resolvable:$true] %s51
      %54 = dma.hbm_to_vmem [thread:$0]  %s2, 16, %s52, [#allocation6]
    $region13: #{transformer_block.1} parent=1 // pred_fallthru
      _
    // Predicated region
    $region14: #{transformer_block.1} parent=1 // pred_check
      _
    $region15: #{transformer_block.1} parent=1 // pred_check_branch
      %56 = sbr.rel (0) target = $region17
    $region16: #{transformer_block.1} parent=1 // pred_region
      %s58 = ssub.s32 3072, 3072
      %59 = vsyncadd [#allocation9], %s58
      %s60 = sshll.u32 [#allocation8], 4
      %s61 = int_to_ptr.vmem [resolvable:$true] %s60
      %66 = dma.hbm_to_vmem [thread:$0]  %s3, 3072, %s61, [#allocation9], 192, 192, 12
    $region17: #{transformer_block.1} parent=1 // pred_fallthru
      _
    // Predicated region
    $region18: #{transformer_block.1} parent=1 // pred_check
      _
    $region19: #{transformer_block.1} parent=1 // pred_check_branch
      %68 = sbr.rel (0) target = $region21
    $region20: #{transformer_block.1} parent=1 // pred_region
      _
    $region21: #{transformer_block.1} parent=1 // pred_fallthru
      _
    // Predicated region
    $region22: #{transformer_block.1} parent=1 // pred_check
      _
    $region23: #{transformer_block.1} parent=1 // pred_check_branch
      %70 = sbr.rel (0) target = $region25
    $region24: #{transformer_block.1} parent=1 // pred_region
      %s72 = ssub.s32 1024, 1024
      %73 = vsyncadd [#allocation9], %s72
      %s74 = sshll.u32 [#allocation10], 4
      %s75 = int_to_ptr.vmem [resolvable:$true] %s74
      %80 = dma.hbm_to_vmem [thread:$0]  %s5, 1024, %s75, [#allocation9], 64, 64, 4
    $region25: #{transformer_block.1} parent=1 // pred_fallthru
      _
    // Predicated region
    $region26: #{transformer_block.1} parent=1 // pred_check
      _
    $region27: #{transformer_block.1} parent=1 // pred_check_branch
      %82 = sbr.rel (0) target = $region29
    $region28: #{transformer_block.1} parent=1 // pred_region
      _
    $region29: #{transformer_block.1} parent=1 // pred_fallthru
      _
    // Predicated region
    $region30: #{transformer_block.1} parent=1 // pred_check
      _
    $region31: #{transformer_block.1} parent=1 // pred_check_branch
      %84 = sbr.rel (0) target = $region33
    $region32: #{transformer_block.1} parent=1 // pred_region
      _
    $region33: #{transformer_block.1} parent=1 // pred_fallthru
      _
    // Predicated region
    $region34: #{transformer_block.1} parent=1 // pred_check
      _
    $region35: #{transformer_block.1} parent=1 // pred_check_branch
      %86 = sbr.rel (0) target = $region37
    $region36: #{transformer_block.1} parent=1 // pred_region
      _
    $region37: #{transformer_block.1} parent=1 // pred_fallthru
      _
    // Predicated region
    $region38: #{transformer_block.1} parent=1 // pred_check
      _
    $region39: #{transformer_block.1} parent=1 // pred_check_branch
      %88 = sbr.rel (0) target = $region41
    $region40: #{transformer_block.1} parent=1 // pred_region
      %s90 = ssub.s32 2048, 2048
      %91 = vsyncadd [#allocation12], %s90
      %s92 = sshll.u32 [#allocation11], 4
      %s93 = int_to_ptr.vmem [resolvable:$true] %s92
      %98 = dma.hbm_to_vmem [thread:$0]  %s9, 2048, %s93, [#allocation12], 128, 128, 8
    $region41: #{transformer_block.1} parent=1 // pred_fallthru
      _
    // Predicated region
    $region42: #{transformer_block.1} parent=1 // pred_check
      _
    $region43: #{transformer_block.1} parent=1 // pred_check_branch
      %100 = sbr.rel (0) target = $region45
    $region44: #{transformer_block.1} parent=1 // pred_region
      _
    $region45: #{transformer_block.1} parent=1 // pred_fallthru
      _
    // Predicated region
    $region46: #{transformer_block.1} parent=1 // pred_check
      _
    $region47: #{transformer_block.1} parent=1 // pred_check_branch
      %102 = sbr.rel (0) target = $region49
    $region48: #{transformer_block.1} parent=1 // pred_region
      %s104 = ssub.s32 2048, 2048
      %105 = vsyncadd [#allocation12], %s104
      %s106 = sshll.u32 [#allocation13], 4
      %s107 = int_to_ptr.vmem [resolvable:$true] %s106
      %112 = dma.hbm_to_vmem [thread:$0]  %s11, 2048, %s107, [#allocation12], 64, 64, 4
    $region49: #{transformer_block.1} parent=1 // pred_fallthru
      _
    // Predicated region
    $region50: #{transformer_block.1} parent=1 // pred_check
      _
    $region51: #{transformer_block.1} parent=1 // pred_check_branch
      %114 = sbr.rel (0) target = $region53
    $region52: #{transformer_block.1} parent=1 // pred_region
      _
    $region53: #{transformer_block.1} parent=1 // pred_fallthru
      _
    // Predicated region
    $region54: #{transformer_block.1} parent=1 // pred_check
      _
    $region55: #{transformer_block.1} parent=1 // pred_check_branch
      %116 = sbr.rel (0) target = $region57
    $region56: #{transformer_block.1} parent=1 // pred_region
      %117 = dma.done [#allocation3], 256
    $region57: #{transformer_block.1} parent=1 // pred_fallthru
      _
    // Predicated region
    $region58: #{transformer_block.1} parent=1 // pred_check
      _
    $region59: #{transformer_block.1} parent=1 // pred_check_branch
      %119 = sbr.rel (0) target = $region61
    $region60: #{transformer_block.1} parent=1 // pred_region
      %120 = dma.done [#allocation6], 16
    $region61: #{transformer_block.1} parent=1 // pred_fallthru
      _
    // Predicated region
    $region62: #{transformer_block.1} parent=1 // pred_check
      _
    $region63: #{transformer_block.1} parent=1 // pred_check_branch
      %122 = sbr.rel (0) target = $region65
    $region64: #{transformer_block.1} parent=1 // pred_region
      %123 = dma.done [#allocation6], 16
    $region65: #{transformer_block.1} parent=1 // pred_fallthru
      _
    // Predicated region
    $region66: #{transformer_block.1} parent=1 // pred_check
      _
    $region67: #{transformer_block.1} parent=1 // pred_check_branch
      %125 = sbr.rel (0) target = $region69
    $region68: #{transformer_block.1} parent=1 // pred_region
      %126 = dma.done [#allocation9], 3072
    $region69: #{transformer_block.1} parent=1 // pred_fallthru
      _
    // Predicated region
    $region70: #{transformer_block.1} parent=1 // pred_check
      _
    $region71: #{transformer_block.1} parent=1 // pred_check_branch
      %128 = sbr.rel (0) target = $region73
    $region72: #{transformer_block.1} parent=1 // pred_region
      %129 = dma.done [#allocation9], 1024
    $region73: #{transformer_block.1} parent=1 // pred_fallthru
      _
    // Predicated region
    $region74: #{transformer_block.1} parent=1 // pred_check
      _
    $region75: #{transformer_block.1} parent=1 // pred_check_branch
      %131 = sbr.rel (0) target = $region77
    $region76: #{transformer_block.1} parent=1 // pred_region
      %132 = dma.done [#allocation12], 2048
    $region77: #{transformer_block.1} parent=1 // pred_fallthru
      _
    // Predicated region
    $region78: #{transformer_block.1} parent=1 // pred_check
      _
    $region79: #{transformer_block.1} parent=1 // pred_check_branch
      %134 = sbr.rel (0) target = $region81
    $region80: #{transformer_block.1} parent=1 // pred_region
      %135 = dma.done [#allocation12], 2048
    $region81: #{transformer_block.1} parent=1 // pred_fallthru
      _
    %v137 = vld [vmem:[#allocation2] sm:$0xff]
    %v138 = vld [vmem:[#allocation2 + $0x8] sm:$0xff]
    %v139 = vld [vmem:[#allocation5] sm:$0x1]
    %v140 = vld [vmem:[#allocation7] sm:$0x1]
    %141 = vadd.xlane.f32.xlu0 %v137
    %v142 = vpop.xlane.xlu0 %141
    %143 = vadd.xlane.f32.xlu0 %v138
    %v144 = vpop.xlane.xlu0 %143
    %v145 = vmul.f32 %v137, %v137
    %v146 = vmul.f32 %v138, %v138
    %147 = vadd.xlane.f32.xlu0 %v145
    %v148 = vpop.xlane.xlu0 %147
    %149 = vadd.xlane.f32.xlu0 %v146
    %v150 = vpop.xlane.xlu0 %149
    %v151 = vmul.f32 %v142, 0.0078125
    %v152 = vmul.f32 %v144, 0.0078125
    %v153 = vmul.f32 %v148, 0.0078125
    %v154 = vmul.f32 %v150, 0.0078125
    %v155 = vmul.f32 %v151, %v151
    %v156 = vmul.f32 %v152, %v152
    %v157 = vsub.f32 %v153, %v155
    %v158 = vsub.f32 %v154, %v156
    %v159 = vadd.f32 %v157, 1e-05
    %v160 = vadd.f32 %v158, 1e-05
    %v161 = vrsqrt.pop %v159
    %v162 = vrsqrt.pop %v160
    %v163 = vsub.f32 %v137, %v151
    %v164 = vsub.f32 %v138, %v152
    %v165 = vmul.f32 %v163, %v161
    %v166 = vmul.f32 %v164, %v162
    %v168 = vlaneseq
    %v169 = vshrl.u32 %v168, 7
    %v170 = vsub.s32 0, %v169
    %v171 = vrot.slane %v139, %v170
    %v173 = vmul.f32 %v165, %v171
    %v174 = vmul.f32 %v166, %v171
    %v176 = vlaneseq
    %v177 = vshrl.u32 %v176, 7
    %v178 = vsub.s32 0, %v177
    %v179 = vrot.slane %v140, %v178
    %v181 = vadd.f32 %v173, %v179
    %v182 = vadd.f32 %v174, %v179
    %v183 = vpack.c.bf16 %v182, %v181
    %v184 = vld [vmem:[#allocation8] sm:$0xff]
    %v185 = vld [vmem:[#allocation8 + $0x8] sm:$0xf]
    %v186 = vld [vmem:[#allocation8 + $0xc] sm:$0xff]
    %v187 = vld [vmem:[#allocation8 + $0x14] sm:$0xf]
    %v188 = vld [vmem:[#allocation8 + $0x18] sm:$0xff]
    %v189 = vld [vmem:[#allocation8 + $0x20] sm:$0xf]
    %v190 = vld [vmem:[#allocation8 + $0x24] sm:$0xff]
    %v191 = vld [vmem:[#allocation8 + $0x2c] sm:$0xf]
    %v192 = vld [vmem:[#allocation8 + $0x30] sm:$0xff]
    %v193 = vld [vmem:[#allocation8 + $0x38] sm:$0xf]
    %v194 = vld [vmem:[#allocation8 + $0x3c] sm:$0xff]
    %v195 = vld [vmem:[#allocation8 + $0x44] sm:$0xf]
    %v196 = vld [vmem:[#allocation8 + $0x48] sm:$0xff]
    %v197 = vld [vmem:[#allocation8 + $0x50] sm:$0xf]
    %v198 = vld [vmem:[#allocation8 + $0x54] sm:$0xff]
    %v199 = vld [vmem:[#allocation8 + $0x5c] sm:$0xf]
    %v200 = vld [vmem:[#allocation8 + $0x60] sm:$0xff]
    %v201 = vld [vmem:[#allocation8 + $0x68] sm:$0xf]
    %v202 = vld [vmem:[#allocation8 + $0x6c] sm:$0xff]
    %v203 = vld [vmem:[#allocation8 + $0x74] sm:$0xf]
    %v204 = vld [vmem:[#allocation8 + $0x78] sm:$0xff]
    %v205 = vld [vmem:[#allocation8 + $0x80] sm:$0xf]
    %v206 = vld [vmem:[#allocation8 + $0x84] sm:$0xff]
    %v207 = vld [vmem:[#allocation8 + $0x8c] sm:$0xf]
    %v208 = vld [vmem:[#allocation8 + $0x90] sm:$0xff]
    %v209 = vld [vmem:[#allocation8 + $0x98] sm:$0xf]
    %v210 = vld [vmem:[#allocation8 + $0x9c] sm:$0xff]
    %v211 = vld [vmem:[#allocation8 + $0xa4] sm:$0xf]
    %v212 = vld [vmem:[#allocation8 + $0xa8] sm:$0xff]
    %v213 = vld [vmem:[#allocation8 + $0xb0] sm:$0xf]
    %v214 = vld [vmem:[#allocation8 + $0xb4] sm:$0xff]
    %v215 = vld [vmem:[#allocation8 + $0xbc] sm:$0xf]
    %v216 = vld [vmem:[%s4] sm:$0x7]
    %v218 = vlaneseq
    %v219 = vshrl.u32 %v218, 7
    %v220 = vsub.s32 0, %v219
    %v221 = vrot.slane %v216, %v220
    %v222 = vlaneseq
    %v223 = vshrl.u32 %v222, 7
    %v224 = vsub.s32 1, %v223
    %v225 = vrot.slane %v216, %v224
    %v226 = vlaneseq
    %v227 = vshrl.u32 %v226, 7
    %v228 = vsub.s32 2, %v227
    %v229 = vrot.slane %v216, %v228
    %v265 = vunpack.c.l.b16 %v184
    %v266 = vunpack.c.h.b16 %v184
    %v267 = vunpack.c.l.b16 %v185
    %v268 = vunpack.c.l.b16 %v186
    %v269 = vunpack.c.h.b16 %v186
    %v270 = vunpack.c.l.b16 %v187
    %v271 = vunpack.c.l.b16 %v188
    %v272 = vunpack.c.h.b16 %v188
    %v273 = vunpack.c.l.b16 %v189
    %v274 = vunpack.c.l.b16 %v190
    %v275 = vunpack.c.h.b16 %v190
    %v276 = vunpack.c.l.b16 %v191
    %v277 = vunpack.c.l.b16 %v192
    %v278 = vunpack.c.h.b16 %v192
    %v279 = vunpack.c.l.b16 %v193
    %v280 = vunpack.c.l.b16 %v194
    %v281 = vunpack.c.h.b16 %v194
    %v282 = vunpack.c.l.b16 %v195
    %v283 = vunpack.c.l.b16 %v196
    %v284 = vunpack.c.h.b16 %v196
    %v285 = vunpack.c.l.b16 %v197
    %v286 = vunpack.c.l.b16 %v198
    %v287 = vunpack.c.h.b16 %v198
    %v288 = vunpack.c.l.b16 %v199
    %v289 = vunpack.c.l.b16 %v200
    %v290 = vunpack.c.h.b16 %v200
    %v291 = vunpack.c.l.b16 %v201
    %v292 = vunpack.c.l.b16 %v202
    %v293 = vunpack.c.h.b16 %v202
    %v294 = vunpack.c.l.b16 %v203
    %v295 = vunpack.c.l.b16 %v204
    %v296 = vunpack.c.h.b16 %v204
    %v297 = vunpack.c.l.b16 %v205
    %v298 = vunpack.c.l.b16 %v206
    %v299 = vunpack.c.h.b16 %v206
    %v300 = vunpack.c.l.b16 %v207
    %v301 = vunpack.c.l.b16 %v208
    %v302 = vunpack.c.h.b16 %v208
    %v303 = vunpack.c.l.b16 %v209
    %v304 = vunpack.c.l.b16 %v210
    %v305 = vunpack.c.h.b16 %v210
    %v306 = vunpack.c.l.b16 %v211
    %v307 = vunpack.c.l.b16 %v212
    %v308 = vunpack.c.h.b16 %v212
    %v309 = vunpack.c.l.b16 %v213
    %v310 = vunpack.c.l.b16 %v214
    %v311 = vunpack.c.h.b16 %v214
    %v312 = vunpack.c.l.b16 %v215
    %v313 = vpack.c.b16 %v268, %v265
    %v314 = vpack.c.b16 %v269, %v266
    %v315 = vpack.c.b16 %v270, %v267
    %v316 = vpack.c.b16 %v274, %v271
    %v317 = vpack.c.b16 %v275, %v272
    %v318 = vpack.c.b16 %v276, %v273
    %v319 = vpack.c.b16 %v280, %v277
    %v320 = vpack.c.b16 %v281, %v278
    %v321 = vpack.c.b16 %v282, %v279
    %v322 = vpack.c.b16 %v286, %v283
    %v323 = vpack.c.b16 %v287, %v284
    %v324 = vpack.c.b16 %v288, %v285
    %v325 = vpack.c.b16 %v292, %v289
    %v326 = vpack.c.b16 %v293, %v290
    %v327 = vpack.c.b16 %v294, %v291
    %v328 = vpack.c.b16 %v298, %v295
    %v329 = vpack.c.b16 %v299, %v296
    %v330 = vpack.c.b16 %v300, %v297
    %v331 = vpack.c.b16 %v304, %v301
    %v332 = vpack.c.b16 %v305, %v302
    %v333 = vpack.c.b16 %v306, %v303
    %v334 = vpack.c.b16 %v310, %v307
    %v335 = vpack.c.b16 %v311, %v308
    %v336 = vpack.c.b16 %v312, %v309
    %361 = vmatprep.subr.bf16.mxu0 %v335
    %362 = vmatpush1.bf16.msra.mxu0 %v334
    %363 = vmatprep.subr.bf16.mxu0 %v332
    %364 = vmatpush1.bf16.msra.mxu0 %v331
    %365 = vmatprep.subr.bf16.mxu0 %v329
    %366 = vmatpush1.bf16.msra.mxu0 %v328
    %367 = vmatprep.subr.bf16.mxu0 %v326
    %368 = vmatpush1.bf16.msra.mxu0 %v325
    %369 = vmatprep.subr.bf16.mxu0 %v323
    %370 = vmatpush1.bf16.msra.mxu0 %v322
    %371 = vmatprep.subr.bf16.mxu0 %v320
    %372 = vmatpush1.bf16.msra.mxu0 %v319
    %373 = vmatprep.subr.bf16.mxu0 %v317
    %374 = vmatpush1.bf16.msra.mxu0 %v316
    %375 = vmatprep.subr.bf16.mxu0 %v314
    %376 = vmatpush1.bf16.msra.mxu0 %v313
    %377 = vmatprep.subr.bf16.mxu0 0
    %378 = vmatpush2.bf16.msra.mxu0 0
    %379 = vmatprep.subr.bf16.mxu0 0
    %380 = vmatpush2.bf16.msra.mxu0 0
    %381 = vmatprep.subr.bf16.mxu0 0
    %382 = vmatpush2.bf16.msra.mxu0 0
    %383 = vmatprep.subr.bf16.mxu0 0
    %384 = vmatpush2.bf16.msra.mxu0 0
    %385 = vmatprep.subr.bf16.mxu0 0
    %386 = vmatpush2.bf16.msra.mxu0 0
    %387 = vmatprep.subr.bf16.mxu0 0
    %388 = vmatpush2.bf16.msra.mxu0 0
    %389 = vmatprep.subr.bf16.mxu0 0
    %390 = vmatpush2.bf16.msra.mxu0 0
    %391 = vmatprep.subr.bf16.mxu0 0
    %392 = vmatpush2.bf16.msra.mxu0 0
    %393 = vmatprep.mubr.bf16.mxu0 0
    %394 = vmatmul.mubr.bf16.gmra.mxu0 %v183
    %v395 = vpop.f32.mrf.mxu0
    %v396 = vadd.f32 %v221, %v395
    %v397 = vpop.f32.mrf.mxu0
    %v398 = vadd.f32 %v225, %v397
    %v399 = vpop.f32.mrf.mxu0
    %v400 = vadd.f32 %v221, %v399
    %v401 = vpop.f32.mrf.mxu0
    %v402 = vadd.f32 %v225, %v401
    %403 = vdwg.mxu0
    %404 = vmatprep.subr.bf16.mxu0 0
    %405 = vmatpush1.bf16.msra.mxu0 %v336
    %406 = vmatprep.subr.bf16.mxu0 0
    %407 = vmatpush1.bf16.msra.mxu0 %v333
    %408 = vmatprep.subr.bf16.mxu0 0
    %409 = vmatpush1.bf16.msra.mxu0 %v330
    %410 = vmatprep.subr.bf16.mxu0 0
    %411 = vmatpush1.bf16.msra.mxu0 %v327
    %412 = vmatprep.subr.bf16.mxu0 0
    %413 = vmatpush1.bf16.msra.mxu0 %v324
    %414 = vmatprep.subr.bf16.mxu0 0
    %415 = vmatpush1.bf16.msra.mxu0 %v321
    %416 = vmatprep.subr.bf16.mxu0 0
    %417 = vmatpush1.bf16.msra.mxu0 %v318
    %418 = vmatprep.subr.bf16.mxu0 0
    %419 = vmatpush1.bf16.msra.mxu0 %v315
    %420 = vmatprep.subr.bf16.mxu0 0
    %421 = vmatpush2.bf16.msra.mxu0 0
    %422 = vmatprep.subr.bf16.mxu0 0
    %423 = vmatpush2.bf16.msra.mxu0 0
    %424 = vmatprep.subr.bf16.mxu0 0
    %425 = vmatpush2.bf16.msra.mxu0 0
    %426 = vmatprep.subr.bf16.mxu0 0
    %427 = vmatpush2.bf16.msra.mxu0 0
    %428 = vmatprep.subr.bf16.mxu0 0
    %429 = vmatpush2.bf16.msra.mxu0 0
    %430 = vmatprep.subr.bf16.mxu0 0
    %431 = vmatpush2.bf16.msra.mxu0 0
    %432 = vmatprep.subr.bf16.mxu0 0
    %433 = vmatpush2.bf16.msra.mxu0 0
    %434 = vmatprep.subr.bf16.mxu0 0
    %435 = vmatpush2.bf16.msra.mxu0 0
    %436 = vmatprep.mubr.bf16.mxu0 0
    %437 = vmatmul.mubr.bf16.gmra.mxu0 %v183
    %v438 = vpop.f32.mrf.mxu0
    %v439 = vadd.f32 %v229, %v438
    %v440 = vpop.f32.mrf.mxu0
    %v441 = vpop.f32.mrf.mxu0
    %v442 = vadd.f32 %v229, %v441
    %v443 = vpop.f32.mrf.mxu0
    %444 = vdwg.mxu0
    %v445 = vmul.f32 %v396, 0.125
    %v446 = vmul.f32 %v400, 0.125
    %v447 = vpack.c.bf16 %v445, %v445
    %v448 = vpack.c.bf16 %v446, %v446
    %v449 = vpack.c.bf16 %v398, %v398
    %v450 = vpack.c.bf16 %v402, %v402
    %v451 = vpack.c.bf16 %v439, %v439
    %v452 = vpack.c.bf16 %v442, %v442
    %vm453 = vcmask 523264
    %v455 = vsel %vm453, %v447, 0
    %v458 = vsel %vm453, %v449, 0
    %460 = vmatprep.subr.bf16.mxu0 0
    %461 = vmatpush1.bf16.xpose.msra.mxu0 0
    %462 = vmatprep.subr.bf16.mxu0 0
    %463 = vmatpush1.bf16.xpose.msra.mxu0 0
    %464 = vmatprep.subr.bf16.mxu0 0
    %465 = vmatpush1.bf16.xpose.msra.mxu0 0
    %466 = vmatprep.subr.bf16.mxu0 0
    %467 = vmatpush1.bf16.xpose.msra.mxu0 0
    %468 = vmatprep.subr.bf16.mxu0 0
    %469 = vmatpush1.bf16.xpose.msra.mxu0 0
    %470 = vmatprep.subr.bf16.mxu0 0
    %471 = vmatpush1.bf16.xpose.msra.mxu0 0
    %472 = vmatprep.subr.bf16.mxu0 0
    %473 = vmatpush1.bf16.xpose.msra.mxu0 0
    %474 = vmatprep.subr.bf16.mxu0 0
    %475 = vmatpush1.bf16.xpose.msra.mxu0 %v458
    %476 = vmatprep.subr.bf16.mxu0 0
    %477 = vmatpush2.bf16.xpose.msra.mxu0 0
    %478 = vmatprep.subr.bf16.mxu0 0
    %479 = vmatpush2.bf16.xpose.msra.mxu0 0
    %480 = vmatprep.subr.bf16.mxu0 0
    %481 = vmatpush2.bf16.xpose.msra.mxu0 0
    %482 = vmatprep.subr.bf16.mxu0 0
    %483 = vmatpush2.bf16.xpose.msra.mxu0 0
    %484 = vmatprep.subr.bf16.mxu0 0
    %485 = vmatpush2.bf16.xpose.msra.mxu0 0
    %486 = vmatprep.subr.bf16.mxu0 0
    %487 = vmatpush2.bf16.xpose.msra.mxu0 0
    %488 = vmatprep.subr.bf16.mxu0 0
    %489 = vmatpush2.bf16.xpose.msra.mxu0 0
    %490 = vmatprep.subr.bf16.mxu0 0
    %491 = vmatpush2.bf16.xpose.msra.mxu0 0
    %492 = vmatprep.mubr.bf16.mxu0 0
    %493 = vmatmul.mubr.bf16.gmra.mxu0 %v455
    %v494 = vpop.f32.mrf.mxu0
    %v495 = vadd.f32 0.0, %v494
    %v496 = vpop.f32.mrf.mxu0
    %v497 = vpop.f32.mrf.mxu0
    %v498 = vpop.f32.mrf.mxu0
    %499 = vdwg.mxu0
    %v501 = vsel %vm453, %v448, 0
    %v504 = vsel %vm453, %v450, 0
    %506 = vmatprep.subr.bf16.mxu0 0
    %507 = vmatpush1.bf16.xpose.msra.mxu0 0
    %508 = vmatprep.subr.bf16.mxu0 0
    %509 = vmatpush1.bf16.xpose.msra.mxu0 0
    %510 = vmatprep.subr.bf16.mxu0 0
    %511 = vmatpush1.bf16.xpose.msra.mxu0 0
    %512 = vmatprep.subr.bf16.mxu0 0
    %513 = vmatpush1.bf16.xpose.msra.mxu0 0
    %514 = vmatprep.subr.bf16.mxu0 0
    %515 = vmatpush1.bf16.xpose.msra.mxu0 0
    %516 = vmatprep.subr.bf16.mxu0 0
    %517 = vmatpush1.bf16.xpose.msra.mxu0 0
    %518 = vmatprep.subr.bf16.mxu0 0
    %519 = vmatpush1.bf16.xpose.msra.mxu0 0
    %520 = vmatprep.subr.bf16.mxu0 0
    %521 = vmatpush1.bf16.xpose.msra.mxu0 %v504
    %522 = vmatprep.subr.bf16.mxu0 0
    %523 = vmatpush2.bf16.xpose.msra.mxu0 0
    %524 = vmatprep.subr.bf16.mxu0 0
    %525 = vmatpush2.bf16.xpose.msra.mxu0 0
    %526 = vmatprep.subr.bf16.mxu0 0
    %527 = vmatpush2.bf16.xpose.msra.mxu0 0
    %528 = vmatprep.subr.bf16.mxu0 0
    %529 = vmatpush2.bf16.xpose.msra.mxu0 0
    %530 = vmatprep.subr.bf16.mxu0 0
    %531 = vmatpush2.bf16.xpose.msra.mxu0 0
    %532 = vmatprep.subr.bf16.mxu0 0
    %533 = vmatpush2.bf16.xpose.msra.mxu0 0
    %534 = vmatprep.subr.bf16.mxu0 0
    %535 = vmatpush2.bf16.xpose.msra.mxu0 0
    %536 = vmatprep.subr.bf16.mxu0 0
    %537 = vmatpush2.bf16.xpose.msra.mxu0 0
    %538 = vmatprep.mubr.bf16.mxu0 0
    %539 = vmatmul.mubr.bf16.gmra.mxu0 %v501
    %v540 = vpop.f32.mrf.mxu0
    %v541 = vadd.f32 0.0, %v540
    %v542 = vpop.f32.mrf.mxu0
    %v543 = vpop.f32.mrf.mxu0
    %v544 = vpop.f32.mrf.mxu0
    %545 = vdwg.mxu0
    %vm546 = vcmask 64512
    %v547 = vsel %vm546, %v495, -inf
    %548 = vmax.xlane.f32.xlu0 %v547
    %v549 = vpop.xlane.xlu0 %548
    %v550 = vsel %vm546, %v541, -inf
    %551 = vmax.xlane.f32.xlu0 %v550
    %v552 = vpop.xlane.xlu0 %551
    %v553 = vsub.f32 %v495, %v549
    %v554 = vsub.f32 %v541, %v552
    %v555 = vmul.f32 %v553, 1.442695
    %v556 = vpow.pop %v555
    %v557 = vmul.f32 %v554, 1.442695
    %v558 = vpow.pop %v557
    %v559 = vsel %vm546, %v556, 0.0
    %560 = vadd.xlane.f32.xlu0 %v559
    %v561 = vpop.xlane.xlu0 %560
    %v562 = vsel %vm546, %v558, 0.0
    %563 = vadd.xlane.f32.xlu0 %v562
    %v564 = vpop.xlane.xlu0 %563
    %v565 = vrcp.pop %v561
    %v566 = vrcp.pop %v564
    %v567 = vmul.f32 %v556, %v565
    %v568 = vmul.f32 %v558, %v566
    %v569 = vpack.c.bf16 %v567, %v567
    %v570 = vpack.c.bf16 %v568, %v568
    %v572 = vsel %vm546, %v569, 0
    %vm574 = vcmask 1043456
    %v576 = vsel %vm574, %v451, 0
    %578 = vmatprep.subr.bf16.mxu0 0
    %579 = vmatpush1.bf16.msra.mxu0 0
    %580 = vmatprep.subr.bf16.mxu0 0
    %581 = vmatpush1.bf16.msra.mxu0 0
    %582 = vmatprep.subr.bf16.mxu0 0
    %583 = vmatpush1.bf16.msra.mxu0 0
    %584 = vmatprep.subr.bf16.mxu0 0
    %585 = vmatpush1.bf16.msra.mxu0 0
    %586 = vmatprep.subr.bf16.mxu0 0
    %587 = vmatpush1.bf16.msra.mxu0 0
    %588 = vmatprep.subr.bf16.mxu0 0
    %589 = vmatpush1.bf16.msra.mxu0 0
    %590 = vmatprep.subr.bf16.mxu0 0
    %591 = vmatpush1.bf16.msra.mxu0 0
    %592 = vmatprep.subr.bf16.mxu0 0
    %593 = vmatpush1.bf16.msra.mxu0 %v576
    %594 = vmatprep.subr.bf16.mxu0 0
    %595 = vmatpush2.bf16.msra.mxu0 0
    %596 = vmatprep.subr.bf16.mxu0 0
    %597 = vmatpush2.bf16.msra.mxu0 0
    %598 = vmatprep.subr.bf16.mxu0 0
    %599 = vmatpush2.bf16.msra.mxu0 0
    %600 = vmatprep.subr.bf16.mxu0 0
    %601 = vmatpush2.bf16.msra.mxu0 0
    %602 = vmatprep.subr.bf16.mxu0 0
    %603 = vmatpush2.bf16.msra.mxu0 0
    %604 = vmatprep.subr.bf16.mxu0 0
    %605 = vmatpush2.bf16.msra.mxu0 0
    %606 = vmatprep.subr.bf16.mxu0 0
    %607 = vmatpush2.bf16.msra.mxu0 0
    %608 = vmatprep.subr.bf16.mxu0 0
    %609 = vmatpush2.bf16.msra.mxu0 0
    %610 = vmatprep.mubr.bf16.mxu0 0
    %611 = vmatmul.mubr.bf16.gmra.mxu0 %v572
    %v612 = vpop.f32.mrf.mxu0
    %v613 = vadd.f32 0.0, %v612
    %v614 = vpop.f32.mrf.mxu0
    %v615 = vpop.f32.mrf.mxu0
    %v616 = vpop.f32.mrf.mxu0
    %617 = vdwg.mxu0
    %v619 = vsel %vm546, %v570, 0
    %v622 = vsel %vm574, %v452, 0
    %624 = vmatprep.subr.bf16.mxu0 0
    %625 = vmatpush1.bf16.msra.mxu0 0
    %626 = vmatprep.subr.bf16.mxu0 0
    %627 = vmatpush1.bf16.msra.mxu0 0
    %628 = vmatprep.subr.bf16.mxu0 0
    %629 = vmatpush1.bf16.msra.mxu0 0
    %630 = vmatprep.subr.bf16.mxu0 0
    %631 = vmatpush1.bf16.msra.mxu0 0
    %632 = vmatprep.subr.bf16.mxu0 0
    %633 = vmatpush1.bf16.msra.mxu0 0
    %634 = vmatprep.subr.bf16.mxu0 0
    %635 = vmatpush1.bf16.msra.mxu0 0
    %636 = vmatprep.subr.bf16.mxu0 0
    %637 = vmatpush1.bf16.msra.mxu0 0
    %638 = vmatprep.subr.bf16.mxu0 0
    %639 = vmatpush1.bf16.msra.mxu0 %v622
    %640 = vmatprep.subr.bf16.mxu0 0
    %641 = vmatpush2.bf16.msra.mxu0 0
    %642 = vmatprep.subr.bf16.mxu0 0
    %643 = vmatpush2.bf16.msra.mxu0 0
    %644 = vmatprep.subr.bf16.mxu0 0
    %645 = vmatpush2.bf16.msra.mxu0 0
    %646 = vmatprep.subr.bf16.mxu0 0
    %647 = vmatpush2.bf16.msra.mxu0 0
    %648 = vmatprep.subr.bf16.mxu0 0
    %649 = vmatpush2.bf16.msra.mxu0 0
    %650 = vmatprep.subr.bf16.mxu0 0
    %651 = vmatpush2.bf16.msra.mxu0 0
    %652 = vmatprep.subr.bf16.mxu0 0
    %653 = vmatpush2.bf16.msra.mxu0 0
    %654 = vmatprep.subr.bf16.mxu0 0
    %655 = vmatpush2.bf16.msra.mxu0 0
    %656 = vmatprep.mubr.bf16.mxu0 0
    %657 = vmatmul.mubr.bf16.gmra.mxu0 %v619
    %v658 = vpop.f32.mrf.mxu0
    %v659 = vadd.f32 0.0, %v658
    %v660 = vpop.f32.mrf.mxu0
    %v661 = vpop.f32.mrf.mxu0
    %v662 = vpop.f32.mrf.mxu0
    %663 = vdwg.mxu0
    %665 = vrot.lane.b32.xlu0 %v447, 64
    %v666 = vpop.permute.xlu0 %665
    %668 = vrot.lane.b32.xlu0 %v449, 64
    %v669 = vpop.permute.xlu0 %668
    %v671 = vsel %vm453, %v666, 0
    %v674 = vsel %vm453, %v669, 0
    %676 = vmatprep.subr.bf16.mxu0 0
    %677 = vmatpush1.bf16.xpose.msra.mxu0 0
    %678 = vmatprep.subr.bf16.mxu0 0
    %679 = vmatpush1.bf16.xpose.msra.mxu0 0
    %680 = vmatprep.subr.bf16.mxu0 0
    %681 = vmatpush1.bf16.xpose.msra.mxu0 0
    %682 = vmatprep.subr.bf16.mxu0 0
    %683 = vmatpush1.bf16.xpose.msra.mxu0 0
    %684 = vmatprep.subr.bf16.mxu0 0
    %685 = vmatpush1.bf16.xpose.msra.mxu0 0
    %686 = vmatprep.subr.bf16.mxu0 0
    %687 = vmatpush1.bf16.xpose.msra.mxu0 0
    %688 = vmatprep.subr.bf16.mxu0 0
    %689 = vmatpush1.bf16.xpose.msra.mxu0 0
    %690 = vmatprep.subr.bf16.mxu0 0
    %691 = vmatpush1.bf16.xpose.msra.mxu0 %v674
    %692 = vmatprep.subr.bf16.mxu0 0
    %693 = vmatpush2.bf16.xpose.msra.mxu0 0
    %694 = vmatprep.subr.bf16.mxu0 0
    %695 = vmatpush2.bf16.xpose.msra.mxu0 0
    %696 = vmatprep.subr.bf16.mxu0 0
    %697 = vmatpush2.bf16.xpose.msra.mxu0 0
    %698 = vmatprep.subr.bf16.mxu0 0
    %699 = vmatpush2.bf16.xpose.msra.mxu0 0
    %700 = vmatprep.subr.bf16.mxu0 0
    %701 = vmatpush2.bf16.xpose.msra.mxu0 0
    %702 = vmatprep.subr.bf16.mxu0 0
    %703 = vmatpush2.bf16.xpose.msra.mxu0 0
    %704 = vmatprep.subr.bf16.mxu0 0
    %705 = vmatpush2.bf16.xpose.msra.mxu0 0
    %706 = vmatprep.subr.bf16.mxu0 0
    %707 = vmatpush2.bf16.xpose.msra.mxu0 0
    %708 = vmatprep.mubr.bf16.mxu0 0
    %709 = vmatmul.mubr.bf16.gmra.mxu0 %v671
    %v710 = vpop.f32.mrf.mxu0
    %v711 = vadd.f32 0.0, %v710
    %v712 = vpop.f32.mrf.mxu0
    %v713 = vpop.f32.mrf.mxu0
    %v714 = vpop.f32.mrf.mxu0
    %715 = vdwg.mxu0
    %717 = vrot.lane.b32.xlu0 %v448, 64
    %v718 = vpop.permute.xlu0 %717
    %720 = vrot.lane.b32.xlu0 %v450, 64
    %v721 = vpop.permute.xlu0 %720
    %v723 = vsel %vm453, %v718, 0
    %v726 = vsel %vm453, %v721, 0
    %728 = vmatprep.subr.bf16.mxu0 0
    %729 = vmatpush1.bf16.xpose.msra.mxu0 0
    %730 = vmatprep.subr.bf16.mxu0 0
    %731 = vmatpush1.bf16.xpose.msra.mxu0 0
    %732 = vmatprep.subr.bf16.mxu0 0
    %733 = vmatpush1.bf16.xpose.msra.mxu0 0
    %734 = vmatprep.subr.bf16.mxu0 0
    %735 = vmatpush1.bf16.xpose.msra.mxu0 0
    %736 = vmatprep.subr.bf16.mxu0 0
    %737 = vmatpush1.bf16.xpose.msra.mxu0 0
    %738 = vmatprep.subr.bf16.mxu0 0
    %739 = vmatpush1.bf16.xpose.msra.mxu0 0
    %740 = vmatprep.subr.bf16.mxu0 0
    %741 = vmatpush1.bf16.xpose.msra.mxu0 0
    %742 = vmatprep.subr.bf16.mxu0 0
    %743 = vmatpush1.bf16.xpose.msra.mxu0 %v726
    %744 = vmatprep.subr.bf16.mxu0 0
    %745 = vmatpush2.bf16.xpose.msra.mxu0 0
    %746 = vmatprep.subr.bf16.mxu0 0
    %747 = vmatpush2.bf16.xpose.msra.mxu0 0
    %748 = vmatprep.subr.bf16.mxu0 0
    %749 = vmatpush2.bf16.xpose.msra.mxu0 0
    %750 = vmatprep.subr.bf16.mxu0 0
    %751 = vmatpush2.bf16.xpose.msra.mxu0 0
    %752 = vmatprep.subr.bf16.mxu0 0
    %753 = vmatpush2.bf16.xpose.msra.mxu0 0
    %754 = vmatprep.subr.bf16.mxu0 0
    %755 = vmatpush2.bf16.xpose.msra.mxu0 0
    %756 = vmatprep.subr.bf16.mxu0 0
    %757 = vmatpush2.bf16.xpose.msra.mxu0 0
    %758 = vmatprep.subr.bf16.mxu0 0
    %759 = vmatpush2.bf16.xpose.msra.mxu0 0
    %760 = vmatprep.mubr.bf16.mxu0 0
    %761 = vmatmul.mubr.bf16.gmra.mxu0 %v723
    %v762 = vpop.f32.mrf.mxu0
    %v763 = vadd.f32 0.0, %v762
    %v764 = vpop.f32.mrf.mxu0
    %v765 = vpop.f32.mrf.mxu0
    %v766 = vpop.f32.mrf.mxu0
    %767 = vdwg.mxu0
    %v768 = vsel %vm546, %v711, -inf
    %769 = vmax.xlane.f32.xlu0 %v768
    %v770 = vpop.xlane.xlu0 %769
    %v771 = vsel %vm546, %v763, -inf
    %772 = vmax.xlane.f32.xlu0 %v771
    %v773 = vpop.xlane.xlu0 %772
    %v774 = vsub.f32 %v711, %v770
    %v775 = vsub.f32 %v763, %v773
    %v776 = vmul.f32 %v774, 1.442695
    %v777 = vpow.pop %v776
    %v778 = vmul.f32 %v775, 1.442695
    %v779 = vpow.pop %v778
    %v780 = vsel %vm546, %v777, 0.0
    %781 = vadd.xlane.f32.xlu0 %v780
    %v782 = vpop.xlane.xlu0 %781
    %v783 = vsel %vm546, %v779, 0.0
    %784 = vadd.xlane.f32.xlu0 %v783
    %v785 = vpop.xlane.xlu0 %784
    %v786 = vrcp.pop %v782
    %v787 = vrcp.pop %v785
    %v788 = vmul.f32 %v777, %v786
    %v789 = vmul.f32 %v779, %v787
    %v790 = vpack.c.bf16 %v788, %v788
    %v791 = vpack.c.bf16 %v789, %v789
    %793 = vrot.lane.b32.xlu0 %v451, 64
    %v794 = vpop.permute.xlu0 %793
    %v796 = vsel %vm546, %v790, 0
    %v799 = vsel %vm574, %v794, 0
    %801 = vmatprep.subr.bf16.mxu0 0
    %802 = vmatpush1.bf16.msra.mxu0 0
    %803 = vmatprep.subr.bf16.mxu0 0
    %804 = vmatpush1.bf16.msra.mxu0 0
    %805 = vmatprep.subr.bf16.mxu0 0
    %806 = vmatpush1.bf16.msra.mxu0 0
    %807 = vmatprep.subr.bf16.mxu0 0
    %808 = vmatpush1.bf16.msra.mxu0 0
    %809 = vmatprep.subr.bf16.mxu0 0
    %810 = vmatpush1.bf16.msra.mxu0 0
    %811 = vmatprep.subr.bf16.mxu0 0
    %812 = vmatpush1.bf16.msra.mxu0 0
    %813 = vmatprep.subr.bf16.mxu0 0
    %814 = vmatpush1.bf16.msra.mxu0 0
    %815 = vmatprep.subr.bf16.mxu0 0
    %816 = vmatpush1.bf16.msra.mxu0 %v799
    %817 = vmatprep.subr.bf16.mxu0 0
    %818 = vmatpush2.bf16.msra.mxu0 0
    %819 = vmatprep.subr.bf16.mxu0 0
    %820 = vmatpush2.bf16.msra.mxu0 0
    %821 = vmatprep.subr.bf16.mxu0 0
    %822 = vmatpush2.bf16.msra.mxu0 0
    %823 = vmatprep.subr.bf16.mxu0 0
    %824 = vmatpush2.bf16.msra.mxu0 0
    %825 = vmatprep.subr.bf16.mxu0 0
    %826 = vmatpush2.bf16.msra.mxu0 0
    %827 = vmatprep.subr.bf16.mxu0 0
    %828 = vmatpush2.bf16.msra.mxu0 0
    %829 = vmatprep.subr.bf16.mxu0 0
    %830 = vmatpush2.bf16.msra.mxu0 0
    %831 = vmatprep.subr.bf16.mxu0 0
    %832 = vmatpush2.bf16.msra.mxu0 0
    %833 = vmatprep.mubr.bf16.mxu0 0
    %834 = vmatmul.mubr.bf16.gmra.mxu0 %v796
    %v835 = vpop.f32.mrf.mxu0
    %v836 = vadd.f32 0.0, %v835
    %v837 = vpop.f32.mrf.mxu0
    %v838 = vpop.f32.mrf.mxu0
    %v839 = vpop.f32.mrf.mxu0
    %840 = vdwg.mxu0
    %842 = vrot.lane.b32.xlu0 %v452, 64
    %v843 = vpop.permute.xlu0 %842
    %v845 = vsel %vm546, %v791, 0
    %v848 = vsel %vm574, %v843, 0
    %850 = vmatprep.subr.bf16.mxu0 0
    %851 = vmatpush1.bf16.msra.mxu0 0
    %852 = vmatprep.subr.bf16.mxu0 0
    %853 = vmatpush1.bf16.msra.mxu0 0
    %854 = vmatprep.subr.bf16.mxu0 0
    %855 = vmatpush1.bf16.msra.mxu0 0
    %856 = vmatprep.subr.bf16.mxu0 0
    %857 = vmatpush1.bf16.msra.mxu0 0
    %858 = vmatprep.subr.bf16.mxu0 0
    %859 = vmatpush1.bf16.msra.mxu0 0
    %860 = vmatprep.subr.bf16.mxu0 0
    %861 = vmatpush1.bf16.msra.mxu0 0
    %862 = vmatprep.subr.bf16.mxu0 0
    %863 = vmatpush1.bf16.msra.mxu0 0
    %864 = vmatprep.subr.bf16.mxu0 0
    %865 = vmatpush1.bf16.msra.mxu0 %v848
    %866 = vmatprep.subr.bf16.mxu0 0
    %867 = vmatpush2.bf16.msra.mxu0 0
    %868 = vmatprep.subr.bf16.mxu0 0
    %869 = vmatpush2.bf16.msra.mxu0 0
    %870 = vmatprep.subr.bf16.mxu0 0
    %871 = vmatpush2.bf16.msra.mxu0 0
    %872 = vmatprep.subr.bf16.mxu0 0
    %873 = vmatpush2.bf16.msra.mxu0 0
    %874 = vmatprep.subr.bf16.mxu0 0
    %875 = vmatpush2.bf16.msra.mxu0 0
    %876 = vmatprep.subr.bf16.mxu0 0
    %877 = vmatpush2.bf16.msra.mxu0 0
    %878 = vmatprep.subr.bf16.mxu0 0
    %879 = vmatpush2.bf16.msra.mxu0 0
    %880 = vmatprep.subr.bf16.mxu0 0
    %881 = vmatpush2.bf16.msra.mxu0 0
    %882 = vmatprep.mubr.bf16.mxu0 0
    %883 = vmatmul.mubr.bf16.gmra.mxu0 %v845
    %v884 = vpop.f32.mrf.mxu0
    %v885 = vadd.f32 0.0, %v884
    %v886 = vpop.f32.mrf.mxu0
    %v887 = vpop.f32.mrf.mxu0
    %v888 = vpop.f32.mrf.mxu0
    %889 = vdwg.mxu0
    %892 = vrot.lane.b32.xlu0 %v836, 64
    %v893 = vpop.permute.xlu0 %892
    %894 = vrot.lane.b32.xlu0 %v885, 64
    %v895 = vpop.permute.xlu0 %894
    %v898 = vsel %vm453, %v613, %v893
    %v899 = vsel %vm453, %v659, %v895
    %v900 = vpack.c.bf16 %v899, %v898
    %v901 = vld [vmem:[#allocation10] sm:$0xf]
    %v902 = vld [vmem:[#allocation10 + $0x4] sm:$0xf]
    %v903 = vld [vmem:[#allocation10 + $0x8] sm:$0xf]
    %v904 = vld [vmem:[#allocation10 + $0xc] sm:$0xf]
    %v905 = vld [vmem:[#allocation10 + $0x10] sm:$0xf]
    %v906 = vld [vmem:[#allocation10 + $0x14] sm:$0xf]
    %v907 = vld [vmem:[#allocation10 + $0x18] sm:$0xf]
    %v908 = vld [vmem:[#allocation10 + $0x1c] sm:$0xf]
    %v909 = vld [vmem:[#allocation10 + $0x20] sm:$0xf]
    %v910 = vld [vmem:[#allocation10 + $0x24] sm:$0xf]
    %v911 = vld [vmem:[#allocation10 + $0x28] sm:$0xf]
    %v912 = vld [vmem:[#allocation10 + $0x2c] sm:$0xf]
    %v913 = vld [vmem:[#allocation10 + $0x30] sm:$0xf]
    %v914 = vld [vmem:[#allocation10 + $0x34] sm:$0xf]
    %v915 = vld [vmem:[#allocation10 + $0x38] sm:$0xf]
    %v916 = vld [vmem:[#allocation10 + $0x3c] sm:$0xf]
    %v917 = vld [vmem:[%s6] sm:$0x1]
    %v919 = vlaneseq
    %v920 = vshrl.u32 %v919, 7
    %v921 = vsub.s32 0, %v920
    %v922 = vrot.slane %v917, %v921
    %v940 = vunpack.c.l.b16 %v901
    %v941 = vunpack.c.l.b16 %v902
    %v942 = vunpack.c.l.b16 %v903
    %v943 = vunpack.c.l.b16 %v904
    %v944 = vunpack.c.l.b16 %v905
    %v945 = vunpack.c.l.b16 %v906
    %v946 = vunpack.c.l.b16 %v907
    %v947 = vunpack.c.l.b16 %v908
    %v948 = vunpack.c.l.b16 %v909
    %v949 = vunpack.c.l.b16 %v910
    %v950 = vunpack.c.l.b16 %v911
    %v951 = vunpack.c.l.b16 %v912
    %v952 = vunpack.c.l.b16 %v913
    %v953 = vunpack.c.l.b16 %v914
    %v954 = vunpack.c.l.b16 %v915
    %v955 = vunpack.c.l.b16 %v916
    %v956 = vpack.c.b16 %v941, %v940
    %v957 = vpack.c.b16 %v943, %v942
    %v958 = vpack.c.b16 %v945, %v944
    %v959 = vpack.c.b16 %v947, %v946
    %v960 = vpack.c.b16 %v949, %v948
    %v961 = vpack.c.b16 %v951, %v950
    %v962 = vpack.c.b16 %v953, %v952
    %v963 = vpack.c.b16 %v955, %v954
    %972 = vmatprep.subr.bf16.mxu0 0
    %973 = vmatpush1.bf16.msra.mxu0 %v963
    %974 = vmatprep.subr.bf16.mxu0 0
    %975 = vmatpush1.bf16.msra.mxu0 %v962
    %976 = vmatprep.subr.bf16.mxu0 0
    %977 = vmatpush1.bf16.msra.mxu0 %v961
    %978 = vmatprep.subr.bf16.mxu0 0
    %979 = vmatpush1.bf16.msra.mxu0 %v960
    %980 = vmatprep.subr.bf16.mxu0 0
    %981 = vmatpush1.bf16.msra.mxu0 %v959
    %982 = vmatprep.subr.bf16.mxu0 0
    %983 = vmatpush1.bf16.msra.mxu0 %v958
    %984 = vmatprep.subr.bf16.mxu0 0
    %985 = vmatpush1.bf16.msra.mxu0 %v957
    %986 = vmatprep.subr.bf16.mxu0 0
    %987 = vmatpush1.bf16.msra.mxu0 %v956
    %988 = vmatprep.subr.bf16.mxu0 0
    %989 = vmatpush2.bf16.msra.mxu0 0
    %990 = vmatprep.subr.bf16.mxu0 0
    %991 = vmatpush2.bf16.msra.mxu0 0
    %992 = vmatprep.subr.bf16.mxu0 0
    %993 = vmatpush2.bf16.msra.mxu0 0
    %994 = vmatprep.subr.bf16.mxu0 0
    %995 = vmatpush2.bf16.msra.mxu0 0
    %996 = vmatprep.subr.bf16.mxu0 0
    %997 = vmatpush2.bf16.msra.mxu0 0
    %998 = vmatprep.subr.bf16.mxu0 0
    %999 = vmatpush2.bf16.msra.mxu0 0
    %1000 = vmatprep.subr.bf16.mxu0 0
    %1001 = vmatpush2.bf16.msra.mxu0 0
    %1002 = vmatprep.subr.bf16.mxu0 0
    %1003 = vmatpush2.bf16.msra.mxu0 0
    %1004 = vmatprep.mubr.bf16.mxu0 0
    %1005 = vmatmul.mubr.bf16.gmra.mxu0 %v900
    %v1006 = vpop.f32.mrf.mxu0
    %v1007 = vadd.f32 %v922, %v1006
    %v1008 = vpop.f32.mrf.mxu0
    %v1009 = vpop.f32.mrf.mxu0
    %v1010 = vadd.f32 %v922, %v1009
    %v1011 = vpop.f32.mrf.mxu0
    %1012 = vdwg.mxu0
    %v1013 = vadd.f32 %v1007, %v137
    %v1014 = vadd.f32 %v1010, %v138
    %v1015 = vld [vmem:[%s7] sm:$0x1]
    %v1016 = vld [vmem:[%s8] sm:$0x1]
    %1017 = vadd.xlane.f32.xlu0 %v1013
    %v1018 = vpop.xlane.xlu0 %1017
    %1019 = vadd.xlane.f32.xlu0 %v1014
    %v1020 = vpop.xlane.xlu0 %1019
    %v1021 = vmul.f32 %v1013, %v1013
    %v1022 = vmul.f32 %v1014, %v1014
    %1023 = vadd.xlane.f32.xlu0 %v1021
    %v1024 = vpop.xlane.xlu0 %1023
    %1025 = vadd.xlane.f32.xlu0 %v1022
    %v1026 = vpop.xlane.xlu0 %1025
    %v1027 = vmul.f32 %v1018, 0.0078125
    %v1028 = vmul.f32 %v1020, 0.0078125
    %v1029 = vmul.f32 %v1024, 0.0078125
    %v1030 = vmul.f32 %v1026, 0.0078125
    %v1031 = vmul.f32 %v1027, %v1027
    %v1032 = vmul.f32 %v1028, %v1028
    %v1033 = vsub.f32 %v1029, %v1031
    %v1034 = vsub.f32 %v1030, %v1032
    %v1035 = vadd.f32 %v1033, 1e-05
    %v1036 = vadd.f32 %v1034, 1e-05
    %v1037 = vrsqrt.pop %v1035
    %v1038 = vrsqrt.pop %v1036
    %v1039 = vsub.f32 %v1013, %v1027
    %v1040 = vsub.f32 %v1014, %v1028
    %v1041 = vmul.f32 %v1039, %v1037
    %v1042 = vmul.f32 %v1040, %v1038
    %v1044 = vlaneseq
    %v1045 = vshrl.u32 %v1044, 7
    %v1046 = vsub.s32 0, %v1045
    %v1047 = vrot.slane %v1015, %v1046
    %v1049 = vmul.f32 %v1041, %v1047
    %v1050 = vmul.f32 %v1042, %v1047
    %v1052 = vlaneseq
    %v1053 = vshrl.u32 %v1052, 7
    %v1054 = vsub.s32 0, %v1053
    %v1055 = vrot.slane %v1016, %v1054
    %v1057 = vadd.f32 %v1049, %v1055
    %v1058 = vadd.f32 %v1050, %v1055
    %v1059 = vpack.c.bf16 %v1058, %v1057
    %v1060 = vld [vmem:[#allocation11] sm:$0xff]
    %v1061 = vld [vmem:[#allocation11 + $0x8] sm:$0xff]
    %v1062 = vld [vmem:[#allocation11 + $0x10] sm:$0xff]
    %v1063 = vld [vmem:[#allocation11 + $0x18] sm:$0xff]
    %v1064 = vld [vmem:[#allocation11 + $0x20] sm:$0xff]
    %v1065 = vld [vmem:[#allocation11 + $0x28] sm:$0xff]
    %v1066 = vld [vmem:[#allocation11 + $0x30] sm:$0xff]
    %v1067 = vld [vmem:[#allocation11 + $0x38] sm:$0xff]
    %v1068 = vld [vmem:[#allocation11 + $0x40] sm:$0xff]
    %v1069 = vld [vmem:[#allocation11 + $0x48] sm:$0xff]
    %v1070 = vld [vmem:[#allocation11 + $0x50] sm:$0xff]
    %v1071 = vld [vmem:[#allocation11 + $0x58] sm:$0xff]
    %v1072 = vld [vmem:[#allocation11 + $0x60] sm:$0xff]
    %v1073 = vld [vmem:[#allocation11 + $0x68] sm:$0xff]
    %v1074 = vld [vmem:[#allocation11 + $0x70] sm:$0xff]
    %v1075 = vld [vmem:[#allocation11 + $0x78] sm:$0xff]
    %v1076 = vld [vmem:[%s10] sm:$0x3]
    %v1078 = vlaneseq
    %v1079 = vshrl.u32 %v1078, 7
    %v1080 = vsub.s32 0, %v1079
    %v1081 = vrot.slane %v1076, %v1080
    %v1082 = vlaneseq
    %v1083 = vshrl.u32 %v1082, 7
    %v1084 = vsub.s32 1, %v1083
    %v1085 = vrot.slane %v1076, %v1084
    %v1104 = vunpack.c.l.b16 %v1060
    %v1105 = vunpack.c.h.b16 %v1060
    %v1106 = vunpack.c.l.b16 %v1061
    %v1107 = vunpack.c.h.b16 %v1061
    %v1108 = vunpack.c.l.b16 %v1062
    %v1109 = vunpack.c.h.b16 %v1062
    %v1110 = vunpack.c.l.b16 %v1063
    %v1111 = vunpack.c.h.b16 %v1063
    %v1112 = vunpack.c.l.b16 %v1064
    %v1113 = vunpack.c.h.b16 %v1064
    %v1114 = vunpack.c.l.b16 %v1065
    %v1115 = vunpack.c.h.b16 %v1065
    %v1116 = vunpack.c.l.b16 %v1066
    %v1117 = vunpack.c.h.b16 %v1066
    %v1118 = vunpack.c.l.b16 %v1067
    %v1119 = vunpack.c.h.b16 %v1067
    %v1120 = vunpack.c.l.b16 %v1068
    %v1121 = vunpack.c.h.b16 %v1068
    %v1122 = vunpack.c.l.b16 %v1069
    %v1123 = vunpack.c.h.b16 %v1069
    %v1124 = vunpack.c.l.b16 %v1070
    %v1125 = vunpack.c.h.b16 %v1070
    %v1126 = vunpack.c.l.b16 %v1071
    %v1127 = vunpack.c.h.b16 %v1071
    %v1128 = vunpack.c.l.b16 %v1072
    %v1129 = vunpack.c.h.b16 %v1072
    %v1130 = vunpack.c.l.b16 %v1073
    %v1131 = vunpack.c.h.b16 %v1073
    %v1132 = vunpack.c.l.b16 %v1074
    %v1133 = vunpack.c.h.b16 %v1074
    %v1134 = vunpack.c.l.b16 %v1075
    %v1135 = vunpack.c.h.b16 %v1075
    %v1136 = vpack.c.b16 %v1106, %v1104
    %v1137 = vpack.c.b16 %v1107, %v1105
    %v1138 = vpack.c.b16 %v1110, %v1108
    %v1139 = vpack.c.b16 %v1111, %v1109
    %v1140 = vpack.c.b16 %v1114, %v1112
    %v1141 = vpack.c.b16 %v1115, %v1113
    %v1142 = vpack.c.b16 %v1118, %v1116
    %v1143 = vpack.c.b16 %v1119, %v1117
    %v1144 = vpack.c.b16 %v1122, %v1120
    %v1145 = vpack.c.b16 %v1123, %v1121
    %v1146 = vpack.c.b16 %v1126, %v1124
    %v1147 = vpack.c.b16 %v1127, %v1125
    %v1148 = vpack.c.b16 %v1130, %v1128
    %v1149 = vpack.c.b16 %v1131, %v1129
    %v1150 = vpack.c.b16 %v1134, %v1132
    %v1151 = vpack.c.b16 %v1135, %v1133
    %1168 = vmatprep.subr.bf16.mxu0 %v1151
    %1169 = vmatpush1.bf16.msra.mxu0 %v1150
    %1170 = vmatprep.subr.bf16.mxu0 %v1149
    %1171 = vmatpush1.bf16.msra.mxu0 %v1148
    %1172 = vmatprep.subr.bf16.mxu0 %v1147
    %1173 = vmatpush1.bf16.msra.mxu0 %v1146
    %1174 = vmatprep.subr.bf16.mxu0 %v1145
    %1175 = vmatpush1.bf16.msra.mxu0 %v1144
    %1176 = vmatprep.subr.bf16.mxu0 %v1143
    %1177 = vmatpush1.bf16.msra.mxu0 %v1142
    %1178 = vmatprep.subr.bf16.mxu0 %v1141
    %1179 = vmatpush1.bf16.msra.mxu0 %v1140
    %1180 = vmatprep.subr.bf16.mxu0 %v1139
    %1181 = vmatpush1.bf16.msra.mxu0 %v1138
    %1182 = vmatprep.subr.bf16.mxu0 %v1137
    %1183 = vmatpush1.bf16.msra.mxu0 %v1136
    %1184 = vmatprep.subr.bf16.mxu0 0
    %1185 = vmatpush2.bf16.msra.mxu0 0
    %1186 = vmatprep.subr.bf16.mxu0 0
    %1187 = vmatpush2.bf16.msra.mxu0 0
    %1188 = vmatprep.subr.bf16.mxu0 0
    %1189 = vmatpush2.bf16.msra.mxu0 0
    %1190 = vmatprep.subr.bf16.mxu0 0
    %1191 = vmatpush2.bf16.msra.mxu0 0
    %1192 = vmatprep.subr.bf16.mxu0 0
    %1193 = vmatpush2.bf16.msra.mxu0 0
    %1194 = vmatprep.subr.bf16.mxu0 0
    %1195 = vmatpush2.bf16.msra.mxu0 0
    %1196 = vmatprep.subr.bf16.mxu0 0
    %1197 = vmatpush2.bf16.msra.mxu0 0
    %1198 = vmatprep.subr.bf16.mxu0 0
    %1199 = vmatpush2.bf16.msra.mxu0 0
    %1200 = vmatprep.mubr.bf16.mxu0 0
    %1201 = vmatmul.mubr.bf16.gmra.mxu0 %v1059
    %v1202 = vpop.f32.mrf.mxu0
    %v1203 = vadd.f32 %v1081, %v1202
    %v1204 = vpop.f32.mrf.mxu0
    %v1205 = vadd.f32 %v1085, %v1204
    %v1206 = vpop.f32.mrf.mxu0
    %v1207 = vadd.f32 %v1081, %v1206
    %v1208 = vpop.f32.mrf.mxu0
    %v1209 = vadd.f32 %v1085, %v1208
    %1210 = vdwg.mxu0
    %v1211 = vmul.f32 %v1203, 0.5
    %v1212 = vmul.f32 %v1205, 0.5
    %v1213 = vmul.f32 %v1207, 0.5
    %v1214 = vmul.f32 %v1209, 0.5
    %v1215 = vmul.f32 %v1203, 0.70710677
    %v1216 = vmul.f32 %v1205, 0.70710677
    %v1217 = vmul.f32 %v1207, 0.70710677
    %v1218 = vmul.f32 %v1209, 0.70710677
    %v1219 = verf.f32.pop %v1215
    %v1220 = verf.f32.pop %v1216
    %v1221 = verf.f32.pop %v1217
    %v1222 = verf.f32.pop %v1218
    %v1223 = vadd.f32 %v1219, 1.0
    %v1224 = vadd.f32 %v1220, 1.0
    %v1225 = vadd.f32 %v1221, 1.0
    %v1226 = vadd.f32 %v1222, 1.0
    %v1227 = vmul.f32 %v1211, %v1223
    %v1228 = vmul.f32 %v1212, %v1224
    %v1229 = vmul.f32 %v1213, %v1225
    %v1230 = vmul.f32 %v1214, %v1226
    %v1231 = vpack.c.bf16 %v1229, %v1227
    %v1232 = vpack.c.bf16 %v1230, %v1228
    %v1233 = vld [vmem:[#allocation13] sm:$0xf]
    %v1234 = vld [vmem:[#allocation13 + $0x4] sm:$0xf]
    %v1235 = vld [vmem:[#allocation13 + $0x8] sm:$0xf]
    %v1236 = vld [vmem:[#allocation13 + $0xc] sm:$0xf]
    %v1237 = vld [vmem:[#allocation13 + $0x10] sm:$0xf]
    %v1238 = vld [vmem:[#allocation13 + $0x14] sm:$0xf]
    %v1239 = vld [vmem:[#allocation13 + $0x18] sm:$0xf]
    %v1240 = vld [vmem:[#allocation13 + $0x1c] sm:$0xf]
    %v1241 = vld [vmem:[#allocation13 + $0x20] sm:$0xf]
    %v1242 = vld [vmem:[#allocation13 + $0x24] sm:$0xf]
    %v1243 = vld [vmem:[#allocation13 + $0x28] sm:$0xf]
    %v1244 = vld [vmem:[#allocation13 + $0x2c] sm:$0xf]
    %v1245 = vld [vmem:[#allocation13 + $0x30] sm:$0xf]
    %v1246 = vld [vmem:[#allocation13 + $0x34] sm:$0xf]
    %v1247 = vld [vmem:[#allocation13 + $0x38] sm:$0xf]
    %v1248 = vld [vmem:[#allocation13 + $0x3c] sm:$0xf]
    %v1249 = vld [vmem:[#allocation13 + $0x40] sm:$0xf]
    %v1250 = vld [vmem:[#allocation13 + $0x44] sm:$0xf]
    %v1251 = vld [vmem:[#allocation13 + $0x48] sm:$0xf]
    %v1252 = vld [vmem:[#allocation13 + $0x4c] sm:$0xf]
    %v1253 = vld [vmem:[#allocation13 + $0x50] sm:$0xf]
    %v1254 = vld [vmem:[#allocation13 + $0x54] sm:$0xf]
    %v1255 = vld [vmem:[#allocation13 + $0x58] sm:$0xf]
    %v1256 = vld [vmem:[#allocation13 + $0x5c] sm:$0xf]
    %v1257 = vld [vmem:[#allocation13 + $0x60] sm:$0xf]
    %v1258 = vld [vmem:[#allocation13 + $0x64] sm:$0xf]
    %v1259 = vld [vmem:[#allocation13 + $0x68] sm:$0xf]
    %v1260 = vld [vmem:[#allocation13 + $0x6c] sm:$0xf]
    %v1261 = vld [vmem:[#allocation13 + $0x70] sm:$0xf]
    %v1262 = vld [vmem:[#allocation13 + $0x74] sm:$0xf]
    %v1263 = vld [vmem:[#allocation13 + $0x78] sm:$0xf]
    %v1264 = vld [vmem:[#allocation13 + $0x7c] sm:$0xf]
    %v1265 = vld [vmem:[%s12] sm:$0x1]
    %v1267 = vlaneseq
    %v1268 = vshrl.u32 %v1267, 7
    %v1269 = vsub.s32 0, %v1268
    %v1270 = vrot.slane %v1265, %v1269
    %v1304 = vunpack.c.l.b16 %v1233
    %v1305 = vunpack.c.l.b16 %v1234
    %v1306 = vunpack.c.l.b16 %v1235
    %v1307 = vunpack.c.l.b16 %v1236
    %v1308 = vunpack.c.l.b16 %v1237
    %v1309 = vunpack.c.l.b16 %v1238
    %v1310 = vunpack.c.l.b16 %v1239
    %v1311 = vunpack.c.l.b16 %v1240
    %v1312 = vunpack.c.l.b16 %v1241
    %v1313 = vunpack.c.l.b16 %v1242
    %v1314 = vunpack.c.l.b16 %v1243
    %v1315 = vunpack.c.l.b16 %v1244
    %v1316 = vunpack.c.l.b16 %v1245
    %v1317 = vunpack.c.l.b16 %v1246
    %v1318 = vunpack.c.l.b16 %v1247
    %v1319 = vunpack.c.l.b16 %v1248
    %v1320 = vunpack.c.l.b16 %v1249
    %v1321 = vunpack.c.l.b16 %v1250
    %v1322 = vunpack.c.l.b16 %v1251
    %v1323 = vunpack.c.l.b16 %v1252
    %v1324 = vunpack.c.l.b16 %v1253
    %v1325 = vunpack.c.l.b16 %v1254
    %v1326 = vunpack.c.l.b16 %v1255
    %v1327 = vunpack.c.l.b16 %v1256
    %v1328 = vunpack.c.l.b16 %v1257
    %v1329 = vunpack.c.l.b16 %v1258
    %v1330 = vunpack.c.l.b16 %v1259
    %v1331 = vunpack.c.l.b16 %v1260
    %v1332 = vunpack.c.l.b16 %v1261
    %v1333 = vunpack.c.l.b16 %v1262
    %v1334 = vunpack.c.l.b16 %v1263
    %v1335 = vunpack.c.l.b16 %v1264
    %v1336 = vpack.c.b16 %v1305, %v1304
    %v1337 = vpack.c.b16 %v1307, %v1306
    %v1338 = vpack.c.b16 %v1309, %v1308
    %v1339 = vpack.c.b16 %v1311, %v1310
    %v1340 = vpack.c.b16 %v1313, %v1312
    %v1341 = vpack.c.b16 %v1315, %v1314
    %v1342 = vpack.c.b16 %v1317, %v1316
    %v1343 = vpack.c.b16 %v1319, %v1318
    %v1344 = vpack.c.b16 %v1321, %v1320
    %v1345 = vpack.c.b16 %v1323, %v1322
    %v1346 = vpack.c.b16 %v1325, %v1324
    %v1347 = vpack.c.b16 %v1327, %v1326
    %v1348 = vpack.c.b16 %v1329, %v1328
    %v1349 = vpack.c.b16 %v1331, %v1330
    %v1350 = vpack.c.b16 %v1333, %v1332
    %v1351 = vpack.c.b16 %v1335, %v1334
    %1368 = vmatprep.subr.bf16.mxu0 0
    %1369 = vmatpush1.bf16.msra.mxu0 %v1343
    %1370 = vmatprep.subr.bf16.mxu0 0
    %1371 = vmatpush1.bf16.msra.mxu0 %v1342
    %1372 = vmatprep.subr.bf16.mxu0 0
    %1373 = vmatpush1.bf16.msra.mxu0 %v1341
    %1374 = vmatprep.subr.bf16.mxu0 0
    %1375 = vmatpush1.bf16.msra.mxu0 %v1340
    %1376 = vmatprep.subr.bf16.mxu0 0
    %1377 = vmatpush1.bf16.msra.mxu0 %v1339
    %1378 = vmatprep.subr.bf16.mxu0 0
    %1379 = vmatpush1.bf16.msra.mxu0 %v1338
    %1380 = vmatprep.subr.bf16.mxu0 0
    %1381 = vmatpush1.bf16.msra.mxu0 %v1337
    %1382 = vmatprep.subr.bf16.mxu0 0
    %1383 = vmatpush1.bf16.msra.mxu0 %v1336
    %1384 = vmatprep.subr.bf16.mxu0 0
    %1385 = vmatpush2.bf16.msra.mxu0 %v1351
    %1386 = vmatprep.subr.bf16.mxu0 0
    %1387 = vmatpush2.bf16.msra.mxu0 %v1350
    %1388 = vmatprep.subr.bf16.mxu0 0
    %1389 = vmatpush2.bf16.msra.mxu0 %v1349
    %1390 = vmatprep.subr.bf16.mxu0 0
    %1391 = vmatpush2.bf16.msra.mxu0 %v1348
    %1392 = vmatprep.subr.bf16.mxu0 0
    %1393 = vmatpush2.bf16.msra.mxu0 %v1347
    %1394 = vmatprep.subr.bf16.mxu0 0
    %1395 = vmatpush2.bf16.msra.mxu0 %v1346
    %1396 = vmatprep.subr.bf16.mxu0 0
    %1397 = vmatpush2.bf16.msra.mxu0 %v1345
    %1398 = vmatprep.subr.bf16.mxu0 0
    %1399 = vmatpush2.bf16.msra.mxu0 %v1344
    %1400 = vmatprep.mubr.bf16.mxu0 %v1232
    %1401 = vmatmul.mubr.bf16.gmra.mxu0 %v1231
    %v1402 = vpop.f32.mrf.mxu0
    %v1403 = vadd.f32 %v1270, %v1402
    %v1404 = vpop.f32.mrf.mxu0
    %v1405 = vpop.f32.mrf.mxu0
    %v1406 = vadd.f32 %v1270, %v1405
    %v1407 = vpop.f32.mrf.mxu0
    %1408 = vdwg.mxu0
    %v1409 = vadd.f32 %v1403, %v1013
    %v1410 = vadd.f32 %v1406, %v1014
    %1411 = vst [vmem:[#allocation14] sm:$0xff] %v1409
    %1412 = vst [vmem:[#allocation14 + $0x8] sm:$0xff] %v1410
    // Predicated region
    $region82: #{transformer_block.1} parent=1 // pred_check
      _
    $region83: #{transformer_block.1} parent=1 // pred_check_branch
      %1414 = sbr.rel (0) target = $region85
    $region84: #{transformer_block.1} parent=1 // pred_region
      %s1416 = ssub.s32 256, 256
      %1417 = vsyncadd [#allocation4], %s1416
      %s1418 = sshll.u32 [#allocation14], 4
      %s1419 = int_to_ptr.vmem [resolvable:$true] %s1418
      %1424 = dma.vmem_to_hbm [thread:$0]  %s1419, 256, %s13, [#allocation4], 128, 128, 8
    $region85: #{transformer_block.1} parent=1 // pred_fallthru
      _
    // Predicated region
    $region86: #{transformer_block.1} parent=1 // pred_check
      _
    $region87: #{transformer_block.1} parent=1 // pred_check_branch
      %1426 = sbr.rel (0) target = $region89
    $region88: #{transformer_block.1} parent=1 // pred_region
      %1427 = dma.done [#allocation4], 256
    $region89: #{transformer_block.1} parent=1 // pred_fallthru
      _
    %1428 = vsyncpa [#allocation3], 1
    %1429 = vsyncpa [#allocation6], 1
    %1430 = vsyncpa [#allocation9], 1
    %1431 = vsyncpa [#allocation12], 1
    %1432 = vsyncpa [#allocation4], 1

</llo_original>
